<compile_context>
chip_gen: v5e
topology: v5e:2x2
jax: 0.10.0
libtpu: 0.0.40
codegen_flags: <defaults>
</compile_context>

<pallas_src>
import functools

import jax
import jax.numpy as jnp
from jax import lax
from jax.experimental import pallas as pl
from jax.experimental.pallas import tpu as pltpu

RELU_SLOPE = 0.2
EPS = 1e-5  # torch.nn.InstanceNorm2d default eps


# ---------------- fused Pallas kernel ----------------

def _fused_block_kernel(x_ref, w1s_ref, g_ref, bt_ref, up_ref,
                        wc_ref, wde_ref, wdo_ref, m3_ref, m4_ref, sel_ref,
                        out_ref, down_ref,
                        s1_ref, s2_ref, sd_ref,
                        *, img_w, cout, slope):
    spb, cin, hw = x_ref.shape

    # Small operands, read once per grid step.
    w1s = w1s_ref[...]            # (cout, 9*cin + 1)           conv_1 taps | b1
    wc = wc_ref[...]              # (2*cout, 9*cout + cin + 1)  [w2|0|b2 ; 0|wid|bid]
    wde = wde_ref[...]            # (cout//2, 16*cout)          even down channels
    wdo = wdo_ref[...]            # (cout//2, 16*cout)          odd  down channels
    sel = sel_ref[...]            # (hw, hwo)                   stride-2 pick
    g = g_ref[...]                # (cout, 1) gamma on first half, 0 elsewhere
    bt = bt_ref[...]              # (cout, 1) beta  on first half, 0 elsewhere
    up = up_ref[...]              # (cout, 1) 0 on first half, 1 elsewhere

    # Ones rows carry the biases through the stacked matmuls (written once per step).
    ones_row = jnp.ones((1, hw), jnp.float32)
    s1_ref[pl.ds(9 * cin, 1), :] = ones_row
    s2_ref[pl.ds(9 * cout + cin, 1), :] = ones_row

    def fill_taps(dst_ref, inp, ksize, m_ref):
        # Stack the K*K zero-padded tap shifts of `inp` along the contraction axis.
        # Shifts use pltpu.roll (XLU); host-built masks zero the wrapped lanes.
        nch = inp.shape[0]
        for ky in range(ksize):
            for kx in range(ksize):
                dy, dx = ky - 1, kx - 1
                t = ky * ksize + kx
                if dy == 0 and dx == 0:
                    piece = inp                                # centre tap: no shift/mask
                else:
                    shift = (-(dy * img_w + dx)) % hw
                    piece = pltpu.roll(inp, shift=shift, axis=1) if shift else inp
                    piece = piece * m_ref[pl.ds(t, 1), :]
                dst_ref[pl.ds(t * nch, nch), :] = piece

    for b in range(spb):                                       # static unroll, spb small
        x = x_ref[b]                                           # (cin, hw)

        # ---- conv_1 (3x3, pad 1) + bias: ONE stacked matmul (K = 9*cin + 1) ----
        fill_taps(s1_ref, x, 3, m3_ref)
        z = jnp.dot(w1s, s1_ref[...], preferred_element_type=jnp.float32)   # (cout, hw)

        # ---- Half-Instance-Norm folded into one per-channel scale/offset FMA ----
        mean = jnp.mean(z, axis=1, keepdims=True)
        var = jnp.maximum(jnp.mean(z * z, axis=1, keepdims=True) - mean * mean, 0.0)
        s = g * lax.rsqrt(var + EPS)                           # zero on un-normalised half
        z = z * (up + s) + (bt - mean * s)

        # ---- LeakyReLU (slope < 1 => max form) ----
        z = jnp.maximum(z, slope * z)

        # ---- conv_2 (3x3) + b2 AND 1x1 identity + bid in ONE stacked matmul ----
        # (split after the matmul so relu_2 is applied only to the conv_2 part,
        #  matching the PyTorch ordering: out = relu(conv2(out)) + identity(x))
        fill_taps(s2_ref, z, 3, m3_ref)
        s2_ref[pl.ds(9 * cout, cin), :] = x                    # identity input rides along
        r = jnp.dot(wc, s2_ref[...], preferred_element_type=jnp.float32)    # (2*cout, hw)
        rc = r[:cout]
        o = jnp.maximum(rc, slope * rc) + r[cout:]
        out_ref[b] = o

        # ---- downsample conv (4x4, stride 2, pad 1, no bias) ----
        # Full-resolution tap accumulation (one stacked matmul, K = 16*cout), then a
        # small stride-2 pick matmul; even/odd output channels are produced separately
        # and lane-concatenated so the store is lane-dense (last dim = 2*hwo = 128).
        fill_taps(sd_ref, o, 4, m4_ref)
        od_stack = sd_ref[...]                                 # (16*cout, hw)
        acc_e = jnp.dot(wde, od_stack, preferred_element_type=jnp.float32)
        acc_o = jnp.dot(wdo, od_stack, preferred_element_type=jnp.float32)
        down_ref[b] = jnp.concatenate(
            [jnp.dot(acc_e, sel, preferred_element_type=jnp.float32),
             jnp.dot(acc_o, sel, preferred_element_type=jnp.float32)], axis=-1)


# ---------------- wrapper ----------------

def unet_conv_block(x_nchw, params, *, relu_slope=RELU_SLOPE, samples_per_step=None):
    n, cin, h, w = x_nchw.shape
    cout = params["w1"].shape[0]
    half = cout // 2
    hw = h * w
    ho, wo = h // 2, w // 2
    hwo = ho * wo

    # Fewer, fatter grid steps; keep the parallel extent at 2 when possible so both
    # v7x TensorCores stay busy.
    if samples_per_step is None:
        samples_per_step = n // 2 if (n % 2 == 0 and n >= 2) else 1
    spb = samples_per_step
    assert n % spb == 0, (n, spb)
    grid = (n // spb,)

    # activations: NCHW is channel-major -> free reshape to (N, C, HW)
    x_flat = x_nchw.reshape(n, cin, hw)

    # ---- host-side weight stacking (tap-major along the contraction axis) ----
    w1_flat = jnp.transpose(params["w1"], (0, 2, 3, 1)).reshape(cout, 9 * cin)
    w1s = jnp.concatenate([w1_flat, params["b1"].reshape(cout, 1)], axis=1)   # (cout, 37)

    w2_flat = jnp.transpose(params["w2"], (0, 2, 3, 1)).reshape(cout, 9 * cout)
    wc_top = jnp.concatenate(
        [w2_flat, jnp.zeros((cout, cin), jnp.float32), params["b2"].reshape(cout, 1)],
        axis=1)
    wc_bot = jnp.concatenate(
        [jnp.zeros((cout, 9 * cout), jnp.float32), params["wid"].reshape(cout, cin),
         params["bid"].reshape(cout, 1)], axis=1)
    wc = jnp.concatenate([wc_top, wc_bot], axis=0)             # (2*cout, 9*cout+cin+1)

    wd_flat = jnp.transpose(params["wd"], (0, 2, 3, 1)).reshape(cout, 16 * cout)
    wde = wd_flat[0::2]                                        # even output channels
    wdo = wd_flat[1::2]                                        # odd  output channels

    # HIN params: gamma/beta zeroed on the upper (un-normalised) half; `up` marks it.
    g_masked = jnp.concatenate(
        [params["gamma"], jnp.zeros((cout - half,), jnp.float32)]).reshape(cout, 1)
    b_masked = jnp.concatenate(
        [params["beta"], jnp.zeros((cout - half,), jnp.float32)]).reshape(cout, 1)
    upper = (jnp.arange(cout) >= half).astype(jnp.float32).reshape(cout, 1)

    # ---- per-tap boundary masks (kill the lanes that pltpu.roll wraps around) ----
    r_of_p = jnp.arange(hw) // w
    c_of_p = jnp.arange(hw) % w

    def tap_masks(k):
        rows = []
        for ky in range(k):
            for kx in range(k):
                dy, dx = ky - 1, kx - 1
                rows.append((r_of_p + dy >= 0) & (r_of_p + dy < h) &
                            (c_of_p + dx >= 0) & (c_of_p + dx < w))
        return jnp.stack(rows).astype(jnp.float32)

    mask3 = tap_masks(3)                                       # (9, hw)
    mask4 = tap_masks(4)                                       # (16, hw)

    # stride-2 subsample selection matrix (HW x Ho*Wo); small here.
    # TODO(synk): for large H*W, tile spatially instead (sel grows as O(HW^2/4)).
    p_idx = jnp.arange(hw)[:, None]
    q_idx = jnp.arange(hwo)[None, :]
    sel = (p_idx == 2 * (q_idx // wo) * w + 2 * (q_idx % wo)).astype(jnp.float32)

    def full(a):
        return pl.BlockSpec(a.shape, lambda i, _nd=a.ndim: (0,) * _nd)

    # Explicit VMEM budget (generous; v7x-safe cap of 64 MiB).
    k1 = 9 * cin + 1
    k2 = 9 * cout + cin + 1
    kd = 16 * cout
    block_bytes = 4 * (spb * cin * hw + spb * cout * hw + spb * half * 2 * hwo
                       + cout * k1 + 2 * cout * k2 + cout * kd
                       + 3 * cout + (9 + 16) * hw + hw * hwo)
    scratch_bytes = 4 * hw * (k1 + k2 + kd)
    vmem_limit = int(min(max(3 * block_bytes + 4 * scratch_bytes, 32 << 20), 64 << 20))

    out_flat, down_flat = pl.pallas_call(
        functools.partial(_fused_block_kernel, img_w=w, cout=cout, slope=relu_slope),
        out_shape=(jax.ShapeDtypeStruct((n, cout, hw), jnp.float32),
                   jax.ShapeDtypeStruct((n, half, 2 * hwo), jnp.float32)),
        grid=grid,
        in_specs=[
            pl.BlockSpec((spb, cin, hw), lambda i: (i, 0, 0)),
            full(w1s), full(g_masked), full(b_masked), full(upper),
            full(wc), full(wde), full(wdo),
            full(mask3), full(mask4), full(sel),
        ],
        out_specs=(pl.BlockSpec((spb, cout, hw), lambda i: (i, 0, 0)),
                   pl.BlockSpec((spb, half, 2 * hwo), lambda i: (i, 0, 0))),
        scratch_shapes=[pltpu.VMEM((k1, hw), jnp.float32),
                        pltpu.VMEM((k2, hw), jnp.float32),
                        pltpu.VMEM((kd, hw), jnp.float32)],
        compiler_params=pltpu.CompilerParams(
            dimension_semantics=("parallel",),
            vmem_limit_bytes=vmem_limit),
    )(x_flat, w1s, g_masked, b_masked, upper, wc, wde, wdo, mask3, mask4, sel)

    out = out_flat.reshape(n, cout, h, w)            # free reshape (already NCHW-flat)
    down = down_flat.reshape(n, cout, ho, wo)        # free reshape (contiguous layout)
    return down, out


# ---------------- pure-JAX reference (mirrors the PyTorch forward) ----------------

def _reference(x, params, *, relu_slope=RELU_SLOPE):
    def conv(xx, w_oihw, b, stride, pad):
        out = lax.conv_general_dilated(
            xx, w_oihw, (stride, stride), ((pad, pad), (pad, pad)),
            dimension_numbers=("NCHW", "OIHW", "NCHW"))
        if b is not None:
            out = out + b.reshape(1, -1, 1, 1)
        return out

    cout = params["w1"].shape[0]
    half = cout // 2
    o = conv(x, params["w1"], params["b1"], 1, 1)
    o1, o2 = o[:, :half], o[:, half:]
    mean = jnp.mean(o1, axis=(2, 3), keepdims=True)
    var = jnp.mean((o1 - mean) ** 2, axis=(2, 3), keepdims=True)
    o1 = (o1 - mean) * lax.rsqrt(var + EPS)
    o1 = o1 * params["gamma"].reshape(1, half, 1, 1) + params["beta"].reshape(1, half, 1, 1)
    o = jnp.concatenate([o1, o2], axis=1)
    o = jnp.where(o >= 0, o, relu_slope * o)
    o = conv(o, params["w2"], params["b2"], 1, 1)
    o = jnp.where(o >= 0, o, relu_slope * o)
    o = o + conv(x, params["wid"], params["bid"], 1, 0)
    od = conv(o, params["wd"], None, 2, 1)
    return od, o


if __name__ == "__main__":
    key = jax.random.PRNGKey(0)
    N, CIN, COUT, H, W = 2, 4, 8, 16, 16
    ks = jax.random.split(key, 10)
    params = {
        # PyTorch OIHW conv weight layout
        "w1": 0.1 * jax.random.normal(ks[0], (COUT, CIN, 3, 3), jnp.float32),
        "b1": 0.1 * jax.random.normal(ks[1], (COUT,), jnp.float32),
        "w2": 0.1 * jax.random.normal(ks[2], (COUT, COUT, 3, 3), jnp.float32),
        "b2": 0.1 * jax.random.normal(ks[3], (COUT,), jnp.float32),
        "wid": 0.1 * jax.random.normal(ks[4], (COUT, CIN, 1, 1), jnp.float32),
        "bid": 0.1 * jax.random.normal(ks[5], (COUT,), jnp.float32),
        "wd": 0.1 * jax.random.normal(ks[6], (COUT, COUT, 4, 4), jnp.float32),
        # InstanceNorm(affine=True) params for the first Cout//2 channels
        "gamma": 1.0 + 0.1 * jax.random.normal(ks[7], (COUT // 2,), jnp.float32),
        "beta": 0.1 * jax.random.normal(ks[8], (COUT // 2,), jnp.float32),
    }
    x = jax.random.normal(ks[9], (N, CIN, H, W), jnp.float32)

    down, out = jax.jit(unet_conv_block)(x, params)
    jax.block_until_ready((down, out))

    down_ref, out_ref = _reference(x, params)
    assert out.shape == (N, COUT, H, W), out.shape
    assert down.shape == (N, COUT, H // 2, W // 2), down.shape
    err_out = float(jnp.max(jnp.abs(out - out_ref)))
    err_down = float(jnp.max(jnp.abs(down - down_ref)))
    assert jnp.allclose(out, out_ref, rtol=1e-3, atol=1e-3), err_out
    assert jnp.allclose(down, down_ref, rtol=1e-3, atol=1e-3), err_down
    print("KERNEL_OK")
</pallas_src>

<mosaic_0001>
module attributes {stable_mosaic.version = 11 : i64} {
  func.func @_fused_block_kernel(%arg0: i32, %arg1: memref<1x4x256xf32, #tpu.memory_space<vmem>>, %arg2: memref<8x37xf32, #tpu.memory_space<vmem>>, %arg3: memref<8x1xf32, #tpu.memory_space<vmem>>, %arg4: memref<8x1xf32, #tpu.memory_space<vmem>>, %arg5: memref<8x1xf32, #tpu.memory_space<vmem>>, %arg6: memref<16x77xf32, #tpu.memory_space<vmem>>, %arg7: memref<4x128xf32, #tpu.memory_space<vmem>>, %arg8: memref<4x128xf32, #tpu.memory_space<vmem>>, %arg9: memref<9x256xf32, #tpu.memory_space<vmem>>, %arg10: memref<16x256xf32, #tpu.memory_space<vmem>>, %arg11: memref<256x64xf32, #tpu.memory_space<vmem>>, %arg12: memref<1x8x256xf32, #tpu.memory_space<vmem>>, %arg13: memref<1x4x128xf32, #tpu.memory_space<vmem>>, %arg14: memref<37x256xf32, #tpu.memory_space<vmem>>, %arg15: memref<77x256xf32, #tpu.memory_space<vmem>>, %arg16: memref<128x256xf32, #tpu.memory_space<vmem>>) attributes {dimension_semantics = [#tpu.dimension_semantics<parallel>], iteration_bounds = array<i64: 2>, scalar_prefetch = 0 : i64, scratch_operands = 3 : i64, tpu.core_type = #tpu.core_type<tc>, window_params = [{transform_indices = @transform_0, window_bounds = array<i64: 1, 4, 256>}, {pipeline_mode = #tpu.pipeline_mode<synchronous>, transform_indices = @transform_1, window_bounds = array<i64: 8, 37>}, {pipeline_mode = #tpu.pipeline_mode<synchronous>, transform_indices = @transform_2, window_bounds = array<i64: 8, 1>}, {pipeline_mode = #tpu.pipeline_mode<synchronous>, transform_indices = @transform_3, window_bounds = array<i64: 8, 1>}, {pipeline_mode = #tpu.pipeline_mode<synchronous>, transform_indices = @transform_4, window_bounds = array<i64: 8, 1>}, {pipeline_mode = #tpu.pipeline_mode<synchronous>, transform_indices = @transform_5, window_bounds = array<i64: 16, 77>}, {pipeline_mode = #tpu.pipeline_mode<synchronous>, transform_indices = @transform_6, window_bounds = array<i64: 4, 128>}, {pipeline_mode = #tpu.pipeline_mode<synchronous>, transform_indices = @transform_7, window_bounds = array<i64: 4, 128>}, {pipeline_mode = #tpu.pipeline_mode<synchronous>, transform_indices = @transform_8, window_bounds = array<i64: 9, 256>}, {pipeline_mode = #tpu.pipeline_mode<synchronous>, transform_indices = @transform_9, window_bounds = array<i64: 16, 256>}, {pipeline_mode = #tpu.pipeline_mode<synchronous>, transform_indices = @transform_10, window_bounds = array<i64: 256, 64>}, {transform_indices = @transform_11, window_bounds = array<i64: 1, 8, 256>}, {transform_indices = @transform_12, window_bounds = array<i64: 1, 4, 128>}]} {
    %c0 = arith.constant 0 : index
    %c0_0 = arith.constant 0 : index
    %0 = vector.load %arg2[%c0, %c0_0] : memref<8x37xf32, #tpu.memory_space<vmem>>, vector<8x37xf32>
    %c0_1 = arith.constant 0 : index
    %c0_2 = arith.constant 0 : index
    %1 = vector.load %arg6[%c0_1, %c0_2] : memref<16x77xf32, #tpu.memory_space<vmem>>, vector<16x77xf32>
    %c0_3 = arith.constant 0 : index
    %c0_4 = arith.constant 0 : index
    %2 = vector.load %arg7[%c0_3, %c0_4] : memref<4x128xf32, #tpu.memory_space<vmem>>, vector<4x128xf32>
    %c0_5 = arith.constant 0 : index
    %c0_6 = arith.constant 0 : index
    %3 = vector.load %arg8[%c0_5, %c0_6] : memref<4x128xf32, #tpu.memory_space<vmem>>, vector<4x128xf32>
    %c0_7 = arith.constant 0 : index
    %c0_8 = arith.constant 0 : index
    %4 = vector.load %arg11[%c0_7, %c0_8] : memref<256x64xf32, #tpu.memory_space<vmem>>, vector<256x64xf32>
    %c0_9 = arith.constant 0 : index
    %c0_10 = arith.constant 0 : index
    %5 = vector.load %arg3[%c0_9, %c0_10] : memref<8x1xf32, #tpu.memory_space<vmem>>, vector<8x1xf32>
    %c0_11 = arith.constant 0 : index
    %c0_12 = arith.constant 0 : index
    %6 = vector.load %arg4[%c0_11, %c0_12] : memref<8x1xf32, #tpu.memory_space<vmem>>, vector<8x1xf32>
    %c0_13 = arith.constant 0 : index
    %c0_14 = arith.constant 0 : index
    %7 = vector.load %arg5[%c0_13, %c0_14] : memref<8x1xf32, #tpu.memory_space<vmem>>, vector<8x1xf32>
    %cst = arith.constant 1.000000e+00 : f32
    %8 = vector.broadcast %cst : f32 to vector<1x256xf32>
    %c36 = arith.constant 36 : index
    %c0_15 = arith.constant 0 : index
    %9 = vector.load %arg14[%c36, %c0_15] : memref<37x256xf32, #tpu.memory_space<vmem>>, vector<1x256xf32>
    tpu.vector_store %arg14[%c36, %c0_15], %8 {strides = array<i32>} : memref<37x256xf32, #tpu.memory_space<vmem>>, vector<1x256xf32>,
    %c76 = arith.constant 76 : index
    %c0_16 = arith.constant 0 : index
    %10 = vector.load %arg15[%c76, %c0_16] : memref<77x256xf32, #tpu.memory_space<vmem>>, vector<1x256xf32>
    tpu.vector_store %arg15[%c76, %c0_16], %8 {strides = array<i32>} : memref<77x256xf32, #tpu.memory_space<vmem>>, vector<1x256xf32>,
    %c0_17 = arith.constant 0 : index
    %c0_18 = arith.constant 0 : index
    %c0_19 = arith.constant 0 : index
    %11 = vector.load %arg1[%c0_17, %c0_18, %c0_19] : memref<1x4x256xf32, #tpu.memory_space<vmem>>, vector<1x4x256xf32>
    %12 = vector.shape_cast %11 : vector<1x4x256xf32> to vector<4x256xf32>
    %c17_i32 = arith.constant 17 : i32
    %13 = tpu.dynamic_rotate %12 by %c17_i32 dim 1 : vector<4x256xf32>, i32 -> vector<4x256xf32>
    %c0_20 = arith.constant 0 : index
    %c0_21 = arith.constant 0 : index
    %14 = vector.load %arg9[%c0_20, %c0_21] : memref<9x256xf32, #tpu.memory_space<vmem>>, vector<1x256xf32>
    %15 = vector.broadcast %14 : vector<1x256xf32> to vector<4x256xf32>
    %16 = arith.mulf %13, %15 : vector<4x256xf32>
    %c0_22 = arith.constant 0 : index
    %c0_23 = arith.constant 0 : index
    %17 = vector.load %arg14[%c0_22, %c0_23] : memref<37x256xf32, #tpu.memory_space<vmem>>, vector<4x256xf32>
    tpu.vector_store %arg14[%c0_22, %c0_23], %16 {strides = array<i32>} : memref<37x256xf32, #tpu.memory_space<vmem>>, vector<4x256xf32>,
    %c16_i32 = arith.constant 16 : i32
    %18 = tpu.dynamic_rotate %12 by %c16_i32 dim 1 : vector<4x256xf32>, i32 -> vector<4x256xf32>
    %c1 = arith.constant 1 : index
    %c0_24 = arith.constant 0 : index
    %19 = vector.load %arg9[%c1, %c0_24] : memref<9x256xf32, #tpu.memory_space<vmem>>, vector<1x256xf32>
    %20 = vector.broadcast %19 : vector<1x256xf32> to vector<4x256xf32>
    %21 = arith.mulf %18, %20 : vector<4x256xf32>
    %c4 = arith.constant 4 : index
    %c0_25 = arith.constant 0 : index
    %22 = vector.load %arg14[%c4, %c0_25] : memref<37x256xf32, #tpu.memory_space<vmem>>, vector<4x256xf32>
    tpu.vector_store %arg14[%c4, %c0_25], %21 {strides = array<i32>} : memref<37x256xf32, #tpu.memory_space<vmem>>, vector<4x256xf32>,
    %c15_i32 = arith.constant 15 : i32
    %23 = tpu.dynamic_rotate %12 by %c15_i32 dim 1 : vector<4x256xf32>, i32 -> vector<4x256xf32>
    %c2 = arith.constant 2 : index
    %c0_26 = arith.constant 0 : index
    %24 = vector.load %arg9[%c2, %c0_26] : memref<9x256xf32, #tpu.memory_space<vmem>>, vector<1x256xf32>
    %25 = vector.broadcast %24 : vector<1x256xf32> to vector<4x256xf32>
    %26 = arith.mulf %23, %25 : vector<4x256xf32>
    %c8 = arith.constant 8 : index
    %c0_27 = arith.constant 0 : index
    %27 = vector.load %arg14[%c8, %c0_27] : memref<37x256xf32, #tpu.memory_space<vmem>>, vector<4x256xf32>
    tpu.vector_store %arg14[%c8, %c0_27], %26 {strides = array<i32>} : memref<37x256xf32, #tpu.memory_space<vmem>>, vector<4x256xf32>,
    %c1_i32 = arith.constant 1 : i32
    %28 = tpu.dynamic_rotate %12 by %c1_i32 dim 1 : vector<4x256xf32>, i32 -> vector<4x256xf32>
    %c3 = arith.constant 3 : index
    %c0_28 = arith.constant 0 : index
    %29 = vector.load %arg9[%c3, %c0_28] : memref<9x256xf32, #tpu.memory_space<vmem>>, vector<1x256xf32>
    %30 = vector.broadcast %29 : vector<1x256xf32> to vector<4x256xf32>
    %31 = arith.mulf %28, %30 : vector<4x256xf32>
    %c12 = arith.constant 12 : index
    %c0_29 = arith.constant 0 : index
    %32 = vector.load %arg14[%c12, %c0_29] : memref<37x256xf32, #tpu.memory_space<vmem>>, vector<4x256xf32>
    tpu.vector_store %arg14[%c12, %c0_29], %31 {strides = array<i32>} : memref<37x256xf32, #tpu.memory_space<vmem>>, vector<4x256xf32>,
    %c16 = arith.constant 16 : index
    %c0_30 = arith.constant 0 : index
    %33 = vector.load %arg14[%c16, %c0_30] : memref<37x256xf32, #tpu.memory_space<vmem>>, vector<4x256xf32>
    tpu.vector_store %arg14[%c16, %c0_30], %12 {strides = array<i32>} : memref<37x256xf32, #tpu.memory_space<vmem>>, vector<4x256xf32>,
    %c255_i32 = arith.constant 255 : i32
    %34 = tpu.dynamic_rotate %12 by %c255_i32 dim 1 : vector<4x256xf32>, i32 -> vector<4x256xf32>
    %c5 = arith.constant 5 : index
    %c0_31 = arith.constant 0 : index
    %35 = vector.load %arg9[%c5, %c0_31] : memref<9x256xf32, #tpu.memory_space<vmem>>, vector<1x256xf32>
    %36 = vector.broadcast %35 : vector<1x256xf32> to vector<4x256xf32>
    %37 = arith.mulf %34, %36 : vector<4x256xf32>
    %c20 = arith.constant 20 : index
    %c0_32 = arith.constant 0 : index
    %38 = vector.load %arg14[%c20, %c0_32] : memref<37x256xf32, #tpu.memory_space<vmem>>, vector<4x256xf32>
    tpu.vector_store %arg14[%c20, %c0_32], %37 {strides = array<i32>} : memref<37x256xf32, #tpu.memory_space<vmem>>, vector<4x256xf32>,
    %c241_i32 = arith.constant 241 : i32
    %39 = tpu.dynamic_rotate %12 by %c241_i32 dim 1 : vector<4x256xf32>, i32 -> vector<4x256xf32>
    %c6 = arith.constant 6 : index
    %c0_33 = arith.constant 0 : index
    %40 = vector.load %arg9[%c6, %c0_33] : memref<9x256xf32, #tpu.memory_space<vmem>>, vector<1x256xf32>
    %41 = vector.broadcast %40 : vector<1x256xf32> to vector<4x256xf32>
    %42 = arith.mulf %39, %41 : vector<4x256xf32>
    %c24 = arith.constant 24 : index
    %c0_34 = arith.constant 0 : index
    %43 = vector.load %arg14[%c24, %c0_34] : memref<37x256xf32, #tpu.memory_space<vmem>>, vector<4x256xf32>
    tpu.vector_store %arg14[%c24, %c0_34], %42 {strides = array<i32>} : memref<37x256xf32, #tpu.memory_space<vmem>>, vector<4x256xf32>,
    %c240_i32 = arith.constant 240 : i32
    %44 = tpu.dynamic_rotate %12 by %c240_i32 dim 1 : vector<4x256xf32>, i32 -> vector<4x256xf32>
    %c7 = arith.constant 7 : index
    %c0_35 = arith.constant 0 : index
    %45 = vector.load %arg9[%c7, %c0_35] : memref<9x256xf32, #tpu.memory_space<vmem>>, vector<1x256xf32>
    %46 = vector.broadcast %45 : vector<1x256xf32> to vector<4x256xf32>
    %47 = arith.mulf %44, %46 : vector<4x256xf32>
    %c28 = arith.constant 28 : index
    %c0_36 = arith.constant 0 : index
    %48 = vector.load %arg14[%c28, %c0_36] : memref<37x256xf32, #tpu.memory_space<vmem>>, vector<4x256xf32>
    tpu.vector_store %arg14[%c28, %c0_36], %47 {strides = array<i32>} : memref<37x256xf32, #tpu.memory_space<vmem>>, vector<4x256xf32>,
    %c239_i32 = arith.constant 239 : i32
    %49 = tpu.dynamic_rotate %12 by %c239_i32 dim 1 : vector<4x256xf32>, i32 -> vector<4x256xf32>
    %c8_37 = arith.constant 8 : index
    %c0_38 = arith.constant 0 : index
    %50 = vector.load %arg9[%c8_37, %c0_38] : memref<9x256xf32, #tpu.memory_space<vmem>>, vector<1x256xf32>
    %51 = vector.broadcast %50 : vector<1x256xf32> to vector<4x256xf32>
    %52 = arith.mulf %49, %51 : vector<4x256xf32>
    %c32 = arith.constant 32 : index
    %c0_39 = arith.constant 0 : index
    %53 = vector.load %arg14[%c32, %c0_39] : memref<37x256xf32, #tpu.memory_space<vmem>>, vector<4x256xf32>
    tpu.vector_store %arg14[%c32, %c0_39], %52 {strides = array<i32>} : memref<37x256xf32, #tpu.memory_space<vmem>>, vector<4x256xf32>,
    %c0_40 = arith.constant 0 : index
    %c0_41 = arith.constant 0 : index
    %54 = vector.load %arg14[%c0_40, %c0_41] : memref<37x256xf32, #tpu.memory_space<vmem>>, vector<37x256xf32>
    %cst_42 = arith.constant dense<0.000000e+00> : vector<8x256xf32>
    %55 = tpu.matmul %0, %54, %cst_42 {dimension_numbers = #tpu.dot_dimension_numbers<[1], [0], [0], [1], [0, 0, 1, 1], [], []>} : vector<8x37xf32>, vector<37x256xf32>, vector<8x256xf32> -> vector<8x256xf32>
    %cst_43 = arith.constant dense<0.000000e+00> : vector<8xf32>
    %56 = vector.multi_reduction <add>, %55, %cst_43 [1] : vector<8x256xf32> to vector<8xf32>
    %57 = vector.shape_cast %56 : vector<8xf32> to vector<8x1xf32>
    %cst_44 = arith.constant 2.560000e+02 : f32
    %58 = vector.broadcast %cst_44 : f32 to vector<8x1xf32>
    %59 = arith.divf %57, %58 : vector<8x1xf32>
    %60 = arith.mulf %55, %55 : vector<8x256xf32>
    %cst_45 = arith.constant dense<0.000000e+00> : vector<8xf32>
    %61 = vector.multi_reduction <add>, %60, %cst_45 [1] : vector<8x256xf32> to vector<8xf32>
    %62 = vector.shape_cast %61 : vector<8xf32> to vector<8x1xf32>
    %cst_46 = arith.constant 2.560000e+02 : f32
    %63 = vector.broadcast %cst_46 : f32 to vector<8x1xf32>
    %64 = arith.divf %62, %63 : vector<8x1xf32>
    %65 = arith.mulf %59, %59 : vector<8x1xf32>
    %66 = arith.subf %64, %65 : vector<8x1xf32>
    %cst_47 = arith.constant 0.000000e+00 : f32
    %67 = vector.broadcast %cst_47 : f32 to vector<8x1xf32>
    %68 = arith.maximumf %66, %67 : vector<8x1xf32>
    %cst_48 = arith.constant 9.99999974E-6 : f32
    %69 = vector.broadcast %cst_48 : f32 to vector<8x1xf32>
    %70 = arith.addf %68, %69 : vector<8x1xf32>
    %71 = math.rsqrt %70 : vector<8x1xf32>
    %72 = arith.mulf %5, %71 : vector<8x1xf32>
    %73 = arith.addf %7, %72 : vector<8x1xf32>
    %74 = vector.broadcast %73 : vector<8x1xf32> to vector<8x256xf32>
    %75 = arith.mulf %55, %74 : vector<8x256xf32>
    %76 = arith.mulf %59, %72 : vector<8x1xf32>
    %77 = arith.subf %6, %76 : vector<8x1xf32>
    %78 = vector.broadcast %77 : vector<8x1xf32> to vector<8x256xf32>
    %79 = arith.addf %75, %78 : vector<8x256xf32>
    %cst_49 = arith.constant 2.000000e-01 : f32
    %80 = vector.broadcast %cst_49 : f32 to vector<8x256xf32>
    %81 = arith.mulf %80, %79 : vector<8x256xf32>
    %82 = arith.maximumf %79, %81 : vector<8x256xf32>
    %c17_i32_50 = arith.constant 17 : i32
    %83 = tpu.dynamic_rotate %82 by %c17_i32_50 dim 1 : vector<8x256xf32>, i32 -> vector<8x256xf32>
    %c0_51 = arith.constant 0 : index
    %c0_52 = arith.constant 0 : index
    %84 = vector.load %arg9[%c0_51, %c0_52] : memref<9x256xf32, #tpu.memory_space<vmem>>, vector<1x256xf32>
    %85 = vector.broadcast %84 : vector<1x256xf32> to vector<8x256xf32>
    %86 = arith.mulf %83, %85 : vector<8x256xf32>
    %c0_53 = arith.constant 0 : index
    %c0_54 = arith.constant 0 : index
    %87 = vector.load %arg15[%c0_53, %c0_54] : memref<77x256xf32, #tpu.memory_space<vmem>>, vector<8x256xf32>
    tpu.vector_store %arg15[%c0_53, %c0_54], %86 {strides = array<i32>} : memref<77x256xf32, #tpu.memory_space<vmem>>, vector<8x256xf32>,
    %c16_i32_55 = arith.constant 16 : i32
    %88 = tpu.dynamic_rotate %82 by %c16_i32_55 dim 1 : vector<8x256xf32>, i32 -> vector<8x256xf32>
    %c1_56 = arith.constant 1 : index
    %c0_57 = arith.constant 0 : index
    %89 = vector.load %arg9[%c1_56, %c0_57] : memref<9x256xf32, #tpu.memory_space<vmem>>, vector<1x256xf32>
    %90 = vector.broadcast %89 : vector<1x256xf32> to vector<8x256xf32>
    %91 = arith.mulf %88, %90 : vector<8x256xf32>
    %c8_58 = arith.constant 8 : index
    %c0_59 = arith.constant 0 : index
    %92 = vector.load %arg15[%c8_58, %c0_59] : memref<77x256xf32, #tpu.memory_space<vmem>>, vector<8x256xf32>
    tpu.vector_store %arg15[%c8_58, %c0_59], %91 {strides = array<i32>} : memref<77x256xf32, #tpu.memory_space<vmem>>, vector<8x256xf32>,
    %c15_i32_60 = arith.constant 15 : i32
    %93 = tpu.dynamic_rotate %82 by %c15_i32_60 dim 1 : vector<8x256xf32>, i32 -> vector<8x256xf32>
    %c2_61 = arith.constant 2 : index
    %c0_62 = arith.constant 0 : index
    %94 = vector.load %arg9[%c2_61, %c0_62] : memref<9x256xf32, #tpu.memory_space<vmem>>, vector<1x256xf32>
    %95 = vector.broadcast %94 : vector<1x256xf32> to vector<8x256xf32>
    %96 = arith.mulf %93, %95 : vector<8x256xf32>
    %c16_63 = arith.constant 16 : index
    %c0_64 = arith.constant 0 : index
    %97 = vector.load %arg15[%c16_63, %c0_64] : memref<77x256xf32, #tpu.memory_space<vmem>>, vector<8x256xf32>
    tpu.vector_store %arg15[%c16_63, %c0_64], %96 {strides = array<i32>} : memref<77x256xf32, #tpu.memory_space<vmem>>, vector<8x256xf32>,
    %c1_i32_65 = arith.constant 1 : i32
    %98 = tpu.dynamic_rotate %82 by %c1_i32_65 dim 1 : vector<8x256xf32>, i32 -> vector<8x256xf32>
    %c3_66 = arith.constant 3 : index
    %c0_67 = arith.constant 0 : index
    %99 = vector.load %arg9[%c3_66, %c0_67] : memref<9x256xf32, #tpu.memory_space<vmem>>, vector<1x256xf32>
    %100 = vector.broadcast %99 : vector<1x256xf32> to vector<8x256xf32>
    %101 = arith.mulf %98, %100 : vector<8x256xf32>
    %c24_68 = arith.constant 24 : index
    %c0_69 = arith.constant 0 : index
    %102 = vector.load %arg15[%c24_68, %c0_69] : memref<77x256xf32, #tpu.memory_space<vmem>>, vector<8x256xf32>
    tpu.vector_store %arg15[%c24_68, %c0_69], %101 {strides = array<i32>} : memref<77x256xf32, #tpu.memory_space<vmem>>, vector<8x256xf32>,
    %c32_70 = arith.constant 32 : index
    %c0_71 = arith.constant 0 : index
    %103 = vector.load %arg15[%c32_70, %c0_71] : memref<77x256xf32, #tpu.memory_space<vmem>>, vector<8x256xf32>
    tpu.vector_store %arg15[%c32_70, %c0_71], %82 {strides = array<i32>} : memref<77x256xf32, #tpu.memory_space<vmem>>, vector<8x256xf32>,
    %c255_i32_72 = arith.constant 255 : i32
    %104 = tpu.dynamic_rotate %82 by %c255_i32_72 dim 1 : vector<8x256xf32>, i32 -> vector<8x256xf32>
    %c5_73 = arith.constant 5 : index
    %c0_74 = arith.constant 0 : index
    %105 = vector.load %arg9[%c5_73, %c0_74] : memref<9x256xf32, #tpu.memory_space<vmem>>, vector<1x256xf32>
    %106 = vector.broadcast %105 : vector<1x256xf32> to vector<8x256xf32>
    %107 = arith.mulf %104, %106 : vector<8x256xf32>
    %c40 = arith.constant 40 : index
    %c0_75 = arith.constant 0 : index
    %108 = vector.load %arg15[%c40, %c0_75] : memref<77x256xf32, #tpu.memory_space<vmem>>, vector<8x256xf32>
    tpu.vector_store %arg15[%c40, %c0_75], %107 {strides = array<i32>} : memref<77x256xf32, #tpu.memory_space<vmem>>, vector<8x256xf32>,
    %c241_i32_76 = arith.constant 241 : i32
    %109 = tpu.dynamic_rotate %82 by %c241_i32_76 dim 1 : vector<8x256xf32>, i32 -> vector<8x256xf32>
    %c6_77 = arith.constant 6 : index
    %c0_78 = arith.constant 0 : index
    %110 = vector.load %arg9[%c6_77, %c0_78] : memref<9x256xf32, #tpu.memory_space<vmem>>, vector<1x256xf32>
    %111 = vector.broadcast %110 : vector<1x256xf32> to vector<8x256xf32>
    %112 = arith.mulf %109, %111 : vector<8x256xf32>
    %c48 = arith.constant 48 : index
    %c0_79 = arith.constant 0 : index
    %113 = vector.load %arg15[%c48, %c0_79] : memref<77x256xf32, #tpu.memory_space<vmem>>, vector<8x256xf32>
    tpu.vector_store %arg15[%c48, %c0_79], %112 {strides = array<i32>} : memref<77x256xf32, #tpu.memory_space<vmem>>, vector<8x256xf32>,
    %c240_i32_80 = arith.constant 240 : i32
    %114 = tpu.dynamic_rotate %82 by %c240_i32_80 dim 1 : vector<8x256xf32>, i32 -> vector<8x256xf32>
    %c7_81 = arith.constant 7 : index
    %c0_82 = arith.constant 0 : index
    %115 = vector.load %arg9[%c7_81, %c0_82] : memref<9x256xf32, #tpu.memory_space<vmem>>, vector<1x256xf32>
    %116 = vector.broadcast %115 : vector<1x256xf32> to vector<8x256xf32>
    %117 = arith.mulf %114, %116 : vector<8x256xf32>
    %c56 = arith.constant 56 : index
    %c0_83 = arith.constant 0 : index
    %118 = vector.load %arg15[%c56, %c0_83] : memref<77x256xf32, #tpu.memory_space<vmem>>, vector<8x256xf32>
    tpu.vector_store %arg15[%c56, %c0_83], %117 {strides = array<i32>} : memref<77x256xf32, #tpu.memory_space<vmem>>, vector<8x256xf32>,
    %c239_i32_84 = arith.constant 239 : i32
    %119 = tpu.dynamic_rotate %82 by %c239_i32_84 dim 1 : vector<8x256xf32>, i32 -> vector<8x256xf32>
    %c8_85 = arith.constant 8 : index
    %c0_86 = arith.constant 0 : index
    %120 = vector.load %arg9[%c8_85, %c0_86] : memref<9x256xf32, #tpu.memory_space<vmem>>, vector<1x256xf32>
    %121 = vector.broadcast %120 : vector<1x256xf32> to vector<8x256xf32>
    %122 = arith.mulf %119, %121 : vector<8x256xf32>
    %c64 = arith.constant 64 : index
    %c0_87 = arith.constant 0 : index
    %123 = vector.load %arg15[%c64, %c0_87] : memref<77x256xf32, #tpu.memory_space<vmem>>, vector<8x256xf32>
    tpu.vector_store %arg15[%c64, %c0_87], %122 {strides = array<i32>} : memref<77x256xf32, #tpu.memory_space<vmem>>, vector<8x256xf32>,
    %c72 = arith.constant 72 : index
    %c0_88 = arith.constant 0 : index
    %124 = vector.load %arg15[%c72, %c0_88] : memref<77x256xf32, #tpu.memory_space<vmem>>, vector<4x256xf32>
    tpu.vector_store %arg15[%c72, %c0_88], %12 {strides = array<i32>} : memref<77x256xf32, #tpu.memory_space<vmem>>, vector<4x256xf32>,
    %c0_89 = arith.constant 0 : index
    %c0_90 = arith.constant 0 : index
    %125 = vector.load %arg15[%c0_89, %c0_90] : memref<77x256xf32, #tpu.memory_space<vmem>>, vector<77x256xf32>
    %cst_91 = arith.constant dense<0.000000e+00> : vector<16x256xf32>
    %126 = tpu.matmul %1, %125, %cst_91 {dimension_numbers = #tpu.dot_dimension_numbers<[1], [0], [0], [1], [0, 0, 1, 1], [], []>} : vector<16x77xf32>, vector<77x256xf32>, vector<16x256xf32> -> vector<16x256xf32>
    %127 = vector.extract_strided_slice %126 {offsets = [0, 0], sizes = [8, 256], strides = [1, 1]} : vector<16x256xf32> to vector<8x256xf32>
    %cst_92 = arith.constant 2.000000e-01 : f32
    %128 = vector.broadcast %cst_92 : f32 to vector<8x256xf32>
    %129 = arith.mulf %128, %127 : vector<8x256xf32>
    %130 = arith.maximumf %127, %129 : vector<8x256xf32>
    %131 = vector.extract_strided_slice %126 {offsets = [8, 0], sizes = [8, 256], strides = [1, 1]} : vector<16x256xf32> to vector<8x256xf32>
    %132 = arith.addf %130, %131 : vector<8x256xf32>
    %c0_93 = arith.constant 0 : index
    %c0_94 = arith.constant 0 : index
    %c0_95 = arith.constant 0 : index
    %133 = vector.load %arg12[%c0_93, %c0_94, %c0_95] : memref<1x8x256xf32, #tpu.memory_space<vmem>>, vector<1x8x256xf32>
    %134 = vector.shape_cast %133 : vector<1x8x256xf32> to vector<8x256xf32>
    %135 = vector.shape_cast %132 : vector<8x256xf32> to vector<1x8x256xf32>
    tpu.vector_store %arg12[%c0_93, %c0_94, %c0_95], %135 {strides = array<i32>} : memref<1x8x256xf32, #tpu.memory_space<vmem>>, vector<1x8x256xf32>,
    %c17_i32_96 = arith.constant 17 : i32
    %136 = tpu.dynamic_rotate %132 by %c17_i32_96 dim 1 : vector<8x256xf32>, i32 -> vector<8x256xf32>
    %c0_97 = arith.constant 0 : index
    %c0_98 = arith.constant 0 : index
    %137 = vector.load %arg10[%c0_97, %c0_98] : memref<16x256xf32, #tpu.memory_space<vmem>>, vector<1x256xf32>
    %138 = vector.broadcast %137 : vector<1x256xf32> to vector<8x256xf32>
    %139 = arith.mulf %136, %138 : vector<8x256xf32>
    %c0_99 = arith.constant 0 : index
    %c0_100 = arith.constant 0 : index
    %140 = vector.load %arg16[%c0_99, %c0_100] : memref<128x256xf32, #tpu.memory_space<vmem>>, vector<8x256xf32>
    tpu.vector_store %arg16[%c0_99, %c0_100], %139 {strides = array<i32>} : memref<128x256xf32, #tpu.memory_space<vmem>>, vector<8x256xf32>,
    %c16_i32_101 = arith.constant 16 : i32
    %141 = tpu.dynamic_rotate %132 by %c16_i32_101 dim 1 : vector<8x256xf32>, i32 -> vector<8x256xf32>
    %c1_102 = arith.constant 1 : index
    %c0_103 = arith.constant 0 : index
    %142 = vector.load %arg10[%c1_102, %c0_103] : memref<16x256xf32, #tpu.memory_space<vmem>>, vector<1x256xf32>
    %143 = vector.broadcast %142 : vector<1x256xf32> to vector<8x256xf32>
    %144 = arith.mulf %141, %143 : vector<8x256xf32>
    %c8_104 = arith.constant 8 : index
    %c0_105 = arith.constant 0 : index
    %145 = vector.load %arg16[%c8_104, %c0_105] : memref<128x256xf32, #tpu.memory_space<vmem>>, vector<8x256xf32>
    tpu.vector_store %arg16[%c8_104, %c0_105], %144 {strides = array<i32>} : memref<128x256xf32, #tpu.memory_space<vmem>>, vector<8x256xf32>,
    %c15_i32_106 = arith.constant 15 : i32
    %146 = tpu.dynamic_rotate %132 by %c15_i32_106 dim 1 : vector<8x256xf32>, i32 -> vector<8x256xf32>
    %c2_107 = arith.constant 2 : index
    %c0_108 = arith.constant 0 : index
    %147 = vector.load %arg10[%c2_107, %c0_108] : memref<16x256xf32, #tpu.memory_space<vmem>>, vector<1x256xf32>
    %148 = vector.broadcast %147 : vector<1x256xf32> to vector<8x256xf32>
    %149 = arith.mulf %146, %148 : vector<8x256xf32>
    %c16_109 = arith.constant 16 : index
    %c0_110 = arith.constant 0 : index
    %150 = vector.load %arg16[%c16_109, %c0_110] : memref<128x256xf32, #tpu.memory_space<vmem>>, vector<8x256xf32>
    tpu.vector_store %arg16[%c16_109, %c0_110], %149 {strides = array<i32>} : memref<128x256xf32, #tpu.memory_space<vmem>>, vector<8x256xf32>,
    %c14_i32 = arith.constant 14 : i32
    %151 = tpu.dynamic_rotate %132 by %c14_i32 dim 1 : vector<8x256xf32>, i32 -> vector<8x256xf32>
    %c3_111 = arith.constant 3 : index
    %c0_112 = arith.constant 0 : index
    %152 = vector.load %arg10[%c3_111, %c0_112] : memref<16x256xf32, #tpu.memory_space<vmem>>, vector<1x256xf32>
    %153 = vector.broadcast %152 : vector<1x256xf32> to vector<8x256xf32>
    %154 = arith.mulf %151, %153 : vector<8x256xf32>
    %c24_113 = arith.constant 24 : index
    %c0_114 = arith.constant 0 : index
    %155 = vector.load %arg16[%c24_113, %c0_114] : memref<128x256xf32, #tpu.memory_space<vmem>>, vector<8x256xf32>
    tpu.vector_store %arg16[%c24_113, %c0_114], %154 {strides = array<i32>} : memref<128x256xf32, #tpu.memory_space<vmem>>, vector<8x256xf32>,
    %c1_i32_115 = arith.constant 1 : i32
    %156 = tpu.dynamic_rotate %132 by %c1_i32_115 dim 1 : vector<8x256xf32>, i32 -> vector<8x256xf32>
    %c4_116 = arith.constant 4 : index
    %c0_117 = arith.constant 0 : index
    %157 = vector.load %arg10[%c4_116, %c0_117] : memref<16x256xf32, #tpu.memory_space<vmem>>, vector<1x256xf32>
    %158 = vector.broadcast %157 : vector<1x256xf32> to vector<8x256xf32>
    %159 = arith.mulf %156, %158 : vector<8x256xf32>
    %c32_118 = arith.constant 32 : index
    %c0_119 = arith.constant 0 : index
    %160 = vector.load %arg16[%c32_118, %c0_119] : memref<128x256xf32, #tpu.memory_space<vmem>>, vector<8x256xf32>
    tpu.vector_store %arg16[%c32_118, %c0_119], %159 {strides = array<i32>} : memref<128x256xf32, #tpu.memory_space<vmem>>, vector<8x256xf32>,
    %c40_120 = arith.constant 40 : index
    %c0_121 = arith.constant 0 : index
    %161 = vector.load %arg16[%c40_120, %c0_121] : memref<128x256xf32, #tpu.memory_space<vmem>>, vector<8x256xf32>
    tpu.vector_store %arg16[%c40_120, %c0_121], %132 {strides = array<i32>} : memref<128x256xf32, #tpu.memory_space<vmem>>, vector<8x256xf32>,
    %c255_i32_122 = arith.constant 255 : i32
    %162 = tpu.dynamic_rotate %132 by %c255_i32_122 dim 1 : vector<8x256xf32>, i32 -> vector<8x256xf32>
    %c6_123 = arith.constant 6 : index
    %c0_124 = arith.constant 0 : index
    %163 = vector.load %arg10[%c6_123, %c0_124] : memref<16x256xf32, #tpu.memory_space<vmem>>, vector<1x256xf32>
    %164 = vector.broadcast %163 : vector<1x256xf32> to vector<8x256xf32>
    %165 = arith.mulf %162, %164 : vector<8x256xf32>
    %c48_125 = arith.constant 48 : index
    %c0_126 = arith.constant 0 : index
    %166 = vector.load %arg16[%c48_125, %c0_126] : memref<128x256xf32, #tpu.memory_space<vmem>>, vector<8x256xf32>
    tpu.vector_store %arg16[%c48_125, %c0_126], %165 {strides = array<i32>} : memref<128x256xf32, #tpu.memory_space<vmem>>, vector<8x256xf32>,
    %c254_i32 = arith.constant 254 : i32
    %167 = tpu.dynamic_rotate %132 by %c254_i32 dim 1 : vector<8x256xf32>, i32 -> vector<8x256xf32>
    %c7_127 = arith.constant 7 : index
    %c0_128 = arith.constant 0 : index
    %168 = vector.load %arg10[%c7_127, %c0_128] : memref<16x256xf32, #tpu.memory_space<vmem>>, vector<1x256xf32>
    %169 = vector.broadcast %168 : vector<1x256xf32> to vector<8x256xf32>
    %170 = arith.mulf %167, %169 : vector<8x256xf32>
    %c56_129 = arith.constant 56 : index
    %c0_130 = arith.constant 0 : index
    %171 = vector.load %arg16[%c56_129, %c0_130] : memref<128x256xf32, #tpu.memory_space<vmem>>, vector<8x256xf32>
    tpu.vector_store %arg16[%c56_129, %c0_130], %170 {strides = array<i32>} : memref<128x256xf32, #tpu.memory_space<vmem>>, vector<8x256xf32>,
    %c241_i32_131 = arith.constant 241 : i32
    %172 = tpu.dynamic_rotate %132 by %c241_i32_131 dim 1 : vector<8x256xf32>, i32 -> vector<8x256xf32>
    %c8_132 = arith.constant 8 : index
    %c0_133 = arith.constant 0 : index
    %173 = vector.load %arg10[%c8_132, %c0_133] : memref<16x256xf32, #tpu.memory_space<vmem>>, vector<1x256xf32>
    %174 = vector.broadcast %173 : vector<1x256xf32> to vector<8x256xf32>
    %175 = arith.mulf %172, %174 : vector<8x256xf32>
    %c64_134 = arith.constant 64 : index
    %c0_135 = arith.constant 0 : index
    %176 = vector.load %arg16[%c64_134, %c0_135] : memref<128x256xf32, #tpu.memory_space<vmem>>, vector<8x256xf32>
    tpu.vector_store %arg16[%c64_134, %c0_135], %175 {strides = array<i32>} : memref<128x256xf32, #tpu.memory_space<vmem>>, vector<8x256xf32>,
    %c240_i32_136 = arith.constant 240 : i32
    %177 = tpu.dynamic_rotate %132 by %c240_i32_136 dim 1 : vector<8x256xf32>, i32 -> vector<8x256xf32>
    %c9 = arith.constant 9 : index
    %c0_137 = arith.constant 0 : index
    %178 = vector.load %arg10[%c9, %c0_137] : memref<16x256xf32, #tpu.memory_space<vmem>>, vector<1x256xf32>
    %179 = vector.broadcast %178 : vector<1x256xf32> to vector<8x256xf32>
    %180 = arith.mulf %177, %179 : vector<8x256xf32>
    %c72_138 = arith.constant 72 : index
    %c0_139 = arith.constant 0 : index
    %181 = vector.load %arg16[%c72_138, %c0_139] : memref<128x256xf32, #tpu.memory_space<vmem>>, vector<8x256xf32>
    tpu.vector_store %arg16[%c72_138, %c0_139], %180 {strides = array<i32>} : memref<128x256xf32, #tpu.memory_space<vmem>>, vector<8x256xf32>,
    %c239_i32_140 = arith.constant 239 : i32
    %182 = tpu.dynamic_rotate %132 by %c239_i32_140 dim 1 : vector<8x256xf32>, i32 -> vector<8x256xf32>
    %c10 = arith.constant 10 : index
    %c0_141 = arith.constant 0 : index
    %183 = vector.load %arg10[%c10, %c0_141] : memref<16x256xf32, #tpu.memory_space<vmem>>, vector<1x256xf32>
    %184 = vector.broadcast %183 : vector<1x256xf32> to vector<8x256xf32>
    %185 = arith.mulf %182, %184 : vector<8x256xf32>
    %c80 = arith.constant 80 : index
    %c0_142 = arith.constant 0 : index
    %186 = vector.load %arg16[%c80, %c0_142] : memref<128x256xf32, #tpu.memory_space<vmem>>, vector<8x256xf32>
    tpu.vector_store %arg16[%c80, %c0_142], %185 {strides = array<i32>} : memref<128x256xf32, #tpu.memory_space<vmem>>, vector<8x256xf32>,
    %c238_i32 = arith.constant 238 : i32
    %187 = tpu.dynamic_rotate %132 by %c238_i32 dim 1 : vector<8x256xf32>, i32 -> vector<8x256xf32>
    %c11 = arith.constant 11 : index
    %c0_143 = arith.constant 0 : index
    %188 = vector.load %arg10[%c11, %c0_143] : memref<16x256xf32, #tpu.memory_space<vmem>>, vector<1x256xf32>
    %189 = vector.broadcast %188 : vector<1x256xf32> to vector<8x256xf32>
    %190 = arith.mulf %187, %189 : vector<8x256xf32>
    %c88 = arith.constant 88 : index
    %c0_144 = arith.constant 0 : index
    %191 = vector.load %arg16[%c88, %c0_144] : memref<128x256xf32, #tpu.memory_space<vmem>>, vector<8x256xf32>
    tpu.vector_store %arg16[%c88, %c0_144], %190 {strides = array<i32>} : memref<128x256xf32, #tpu.memory_space<vmem>>, vector<8x256xf32>,
    %c225_i32 = arith.constant 225 : i32
    %192 = tpu.dynamic_rotate %132 by %c225_i32 dim 1 : vector<8x256xf32>, i32 -> vector<8x256xf32>
    %c12_145 = arith.constant 12 : index
    %c0_146 = arith.constant 0 : index
    %193 = vector.load %arg10[%c12_145, %c0_146] : memref<16x256xf32, #tpu.memory_space<vmem>>, vector<1x256xf32>
    %194 = vector.broadcast %193 : vector<1x256xf32> to vector<8x256xf32>
    %195 = arith.mulf %192, %194 : vector<8x256xf32>
    %c96 = arith.constant 96 : index
    %c0_147 = arith.constant 0 : index
    %196 = vector.load %arg16[%c96, %c0_147] : memref<128x256xf32, #tpu.memory_space<vmem>>, vector<8x256xf32>
    tpu.vector_store %arg16[%c96, %c0_147], %195 {strides = array<i32>} : memref<128x256xf32, #tpu.memory_space<vmem>>, vector<8x256xf32>,
    %c224_i32 = arith.constant 224 : i32
    %197 = tpu.dynamic_rotate %132 by %c224_i32 dim 1 : vector<8x256xf32>, i32 -> vector<8x256xf32>
    %c13 = arith.constant 13 : index
    %c0_148 = arith.constant 0 : index
    %198 = vector.load %arg10[%c13, %c0_148] : memref<16x256xf32, #tpu.memory_space<vmem>>, vector<1x256xf32>
    %199 = vector.broadcast %198 : vector<1x256xf32> to vector<8x256xf32>
    %200 = arith.mulf %197, %199 : vector<8x256xf32>
    %c104 = arith.constant 104 : index
    %c0_149 = arith.constant 0 : index
    %201 = vector.load %arg16[%c104, %c0_149] : memref<128x256xf32, #tpu.memory_space<vmem>>, vector<8x256xf32>
    tpu.vector_store %arg16[%c104, %c0_149], %200 {strides = array<i32>} : memref<128x256xf32, #tpu.memory_space<vmem>>, vector<8x256xf32>,
    %c223_i32 = arith.constant 223 : i32
    %202 = tpu.dynamic_rotate %132 by %c223_i32 dim 1 : vector<8x256xf32>, i32 -> vector<8x256xf32>
    %c14 = arith.constant 14 : index
    %c0_150 = arith.constant 0 : index
    %203 = vector.load %arg10[%c14, %c0_150] : memref<16x256xf32, #tpu.memory_space<vmem>>, vector<1x256xf32>
    %204 = vector.broadcast %203 : vector<1x256xf32> to vector<8x256xf32>
    %205 = arith.mulf %202, %204 : vector<8x256xf32>
    %c112 = arith.constant 112 : index
    %c0_151 = arith.constant 0 : index
    %206 = vector.load %arg16[%c112, %c0_151] : memref<128x256xf32, #tpu.memory_space<vmem>>, vector<8x256xf32>
    tpu.vector_store %arg16[%c112, %c0_151], %205 {strides = array<i32>} : memref<128x256xf32, #tpu.memory_space<vmem>>, vector<8x256xf32>,
    %c222_i32 = arith.constant 222 : i32
    %207 = tpu.dynamic_rotate %132 by %c222_i32 dim 1 : vector<8x256xf32>, i32 -> vector<8x256xf32>
    %c15 = arith.constant 15 : index
    %c0_152 = arith.constant 0 : index
    %208 = vector.load %arg10[%c15, %c0_152] : memref<16x256xf32, #tpu.memory_space<vmem>>, vector<1x256xf32>
    %209 = vector.broadcast %208 : vector<1x256xf32> to vector<8x256xf32>
    %210 = arith.mulf %207, %209 : vector<8x256xf32>
    %c120 = arith.constant 120 : index
    %c0_153 = arith.constant 0 : index
    %211 = vector.load %arg16[%c120, %c0_153] : memref<128x256xf32, #tpu.memory_space<vmem>>, vector<8x256xf32>
    tpu.vector_store %arg16[%c120, %c0_153], %210 {strides = array<i32>} : memref<128x256xf32, #tpu.memory_space<vmem>>, vector<8x256xf32>,
    %c0_154 = arith.constant 0 : index
    %c0_155 = arith.constant 0 : index
    %212 = vector.load %arg16[%c0_154, %c0_155] : memref<128x256xf32, #tpu.memory_space<vmem>>, vector<128x256xf32>
    %cst_156 = arith.constant dense<0.000000e+00> : vector<4x256xf32>
    %213 = tpu.matmul %2, %212, %cst_156 {dimension_numbers = #tpu.dot_dimension_numbers<[1], [0], [0], [1], [0, 0, 1, 1], [], []>} : vector<4x128xf32>, vector<128x256xf32>, vector<4x256xf32> -> vector<4x256xf32>
    %cst_157 = arith.constant dense<0.000000e+00> : vector<4x256xf32>
    %214 = tpu.matmul %3, %212, %cst_157 {dimension_numbers = #tpu.dot_dimension_numbers<[1], [0], [0], [1], [0, 0, 1, 1], [], []>} : vector<4x128xf32>, vector<128x256xf32>, vector<4x256xf32> -> vector<4x256xf32>
    %cst_158 = arith.constant dense<0.000000e+00> : vector<4x64xf32>
    %215 = tpu.matmul %213, %4, %cst_158 {dimension_numbers = #tpu.dot_dimension_numbers<[1], [0], [0], [1], [0, 0, 1, 1], [], []>} : vector<4x256xf32>, vector<256x64xf32>, vector<4x64xf32> -> vector<4x64xf32>
    %cst_159 = arith.constant dense<0.000000e+00> : vector<4x64xf32>
    %216 = tpu.matmul %214, %4, %cst_159 {dimension_numbers = #tpu.dot_dimension_numbers<[1], [0], [0], [1], [0, 0, 1, 1], [], []>} : vector<4x256xf32>, vector<256x64xf32>, vector<4x64xf32> -> vector<4x64xf32>
    %217 = tpu.concatenate %215, %216 in 1 : vector<4x64xf32>, vector<4x64xf32> -> vector<4x128xf32>
    %c0_160 = arith.constant 0 : index
    %c0_161 = arith.constant 0 : index
    %c0_162 = arith.constant 0 : index
    %218 = vector.load %arg13[%c0_160, %c0_161, %c0_162] : memref<1x4x128xf32, #tpu.memory_space<vmem>>, vector<1x4x128xf32>
    %219 = vector.shape_cast %218 : vector<1x4x128xf32> to vector<4x128xf32>
    %220 = vector.shape_cast %217 : vector<4x128xf32> to vector<1x4x128xf32>
    tpu.vector_store %arg13[%c0_160, %c0_161, %c0_162], %220 {strides = array<i32>} : memref<1x4x128xf32, #tpu.memory_space<vmem>>, vector<1x4x128xf32>,
    return
  }
  func.func @transform_0(%arg0: i32) -> (i32, i32, i32) {
    %c0_i32 = arith.constant 0 : i32
    %c0_i32_0 = arith.constant 0 : i32
    %c0_i32_1 = arith.constant 0 : i32
    return %arg0, %c0_i32, %c0_i32_0 : i32, i32, i32
  }
  func.func @transform_1(%arg0: i32) -> (i32, i32) {
    %c0_i32 = arith.constant 0 : i32
    %c0_i32_0 = arith.constant 0 : i32
    %c0_i32_1 = arith.constant 0 : i32
    return %c0_i32, %c0_i32_0 : i32, i32
  }
  func.func @transform_2(%arg0: i32) -> (i32, i32) {
    %c0_i32 = arith.constant 0 : i32
    %c0_i32_0 = arith.constant 0 : i32
    %c0_i32_1 = arith.constant 0 : i32
    return %c0_i32, %c0_i32_0 : i32, i32
  }
  func.func @transform_3(%arg0: i32) -> (i32, i32) {
    %c0_i32 = arith.constant 0 : i32
    %c0_i32_0 = arith.constant 0 : i32
    %c0_i32_1 = arith.constant 0 : i32
    return %c0_i32, %c0_i32_0 : i32, i32
  }
  func.func @transform_4(%arg0: i32) -> (i32, i32) {
    %c0_i32 = arith.constant 0 : i32
    %c0_i32_0 = arith.constant 0 : i32
    %c0_i32_1 = arith.constant 0 : i32
    return %c0_i32, %c0_i32_0 : i32, i32
  }
  func.func @transform_5(%arg0: i32) -> (i32, i32) {
    %c0_i32 = arith.constant 0 : i32
    %c0_i32_0 = arith.constant 0 : i32
    %c0_i32_1 = arith.constant 0 : i32
    return %c0_i32, %c0_i32_0 : i32, i32
  }
  func.func @transform_6(%arg0: i32) -> (i32, i32) {
    %c0_i32 = arith.constant 0 : i32
    %c0_i32_0 = arith.constant 0 : i32
    %c0_i32_1 = arith.constant 0 : i32
    return %c0_i32, %c0_i32_0 : i32, i32
  }
  func.func @transform_7(%arg0: i32) -> (i32, i32) {
    %c0_i32 = arith.constant 0 : i32
    %c0_i32_0 = arith.constant 0 : i32
    %c0_i32_1 = arith.constant 0 : i32
    return %c0_i32, %c0_i32_0 : i32, i32
  }
  func.func @transform_8(%arg0: i32) -> (i32, i32) {
    %c0_i32 = arith.constant 0 : i32
    %c0_i32_0 = arith.constant 0 : i32
    %c0_i32_1 = arith.constant 0 : i32
    return %c0_i32, %c0_i32_0 : i32, i32
  }
  func.func @transform_9(%arg0: i32) -> (i32, i32) {
    %c0_i32 = arith.constant 0 : i32
    %c0_i32_0 = arith.constant 0 : i32
    %c0_i32_1 = arith.constant 0 : i32
    return %c0_i32, %c0_i32_0 : i32, i32
  }
  func.func @transform_10(%arg0: i32) -> (i32, i32) {
    %c0_i32 = arith.constant 0 : i32
    %c0_i32_0 = arith.constant 0 : i32
    %c0_i32_1 = arith.constant 0 : i32
    return %c0_i32, %c0_i32_0 : i32, i32
  }
  func.func @transform_11(%arg0: i32) -> (i32, i32, i32) {
    %c0_i32 = arith.constant 0 : i32
    %c0_i32_0 = arith.constant 0 : i32
    %c0_i32_1 = arith.constant 0 : i32
    return %arg0, %c0_i32, %c0_i32_0 : i32, i32, i32
  }
  func.func @transform_12(%arg0: i32) -> (i32, i32, i32) {
    %c0_i32 = arith.constant 0 : i32
    %c0_i32_0 = arith.constant 0 : i32
    %c0_i32_1 = arith.constant 0 : i32
    return %arg0, %c0_i32, %c0_i32_0 : i32, i32, i32
  }
}

</mosaic_0001>

<llo_original>
// kernel: unet_conv_block.1
$region0: #{unet_conv_block.1}
  #allocation0 [shape = 'u32[]', space=smem, size = 0x4, offset = 0x4, fixed_abs, tag = 'smem constant byte address 0x4 - core index']
  #allocation1 [shape = 'u32[72,128]{1,0:T(1,128)}', space=vmem, size = 0x9000, scoped, tag = 'internal scratch']
  #allocation2 [shape = 'f32[37,256]{1,0:T(8,128)}', space=vmem, size = 0xa000, scoped, tag = 'scratch operand']
  #allocation3 [shape = 'f32[77,256]{1,0:T(8,128)}', space=vmem, size = 0x14000, scoped, tag = 'scratch operand']
  #allocation4 [shape = 'f32[128,256]{1,0:T(8,128)}', space=vmem, size = 0x20000, scoped, tag = 'scratch operand']
  %s0 = inlined_call_operand.vmem [shape: f32[2,4,256], index: 0, kind: input, shape index: {}]
  %s1 = inlined_call_operand.vmem [shape: f32[8,37], index: 1, kind: input, shape index: {}]
  %s2 = inlined_call_operand.vmem [shape: f32[8,1], index: 2, kind: input, shape index: {}]
  %s3 = inlined_call_operand.vmem [shape: f32[8,1], index: 3, kind: input, shape index: {}]
  %s4 = inlined_call_operand.vmem [shape: f32[8,1], index: 4, kind: input, shape index: {}]
  %s5 = inlined_call_operand.vmem [shape: f32[16,77], index: 5, kind: input, shape index: {}]
  %s6 = inlined_call_operand.vmem [shape: f32[4,128], index: 6, kind: input, shape index: {}]
  %s7 = inlined_call_operand.vmem [shape: f32[4,128], index: 7, kind: input, shape index: {}]
  %s8 = inlined_call_operand.vmem [shape: f32[9,256], index: 8, kind: input, shape index: {}]
  %s9 = inlined_call_operand.vmem [shape: f32[16,256], index: 9, kind: input, shape index: {}]
  %s10 = inlined_call_operand.vmem [shape: f32[256,64], index: 10, kind: input, shape index: {}]
  %s11 = inlined_call_operand.vmem [shape: f32[2,8,256], index: 11, kind: output, shape index: {0}]
  %s12 = inlined_call_operand.vmem [shape: f32[2,4,128], index: 12, kind: output, shape index: {1}]
  %13 = xla_tuple %s11, %s12
  %s14 = sld [smem:[#allocation0]]
  $region85: #{unet_conv_block.1} parent=0
    _
  %s16 = ssub.s32 1, %s14
  %s17 = scalar_select 0, %s16, %s14
  loop: start=0, step=1, limit=4
  $region2: #{unet_conv_block.1} parent=0 // loop_pre_header
    _
  $region3: #{unet_conv_block.1} parent=0 // loop_header
    %s19 = sphi 0, %s23
    %p20 = scmp.ge.s32.totalorder %s19, 4
    %s29 = sphi 0, %s31
    %s32 = sphi 0, %s29
    %s33 = sphi 0, %s32
    %s49 = sphi 0, %s33
    %s53 = sphi 0, %s53
    %s55 = sphi 0, %s53
    %s56 = sphi 0, %s55
    %s70 = sphi 0, %s56
    %s74 = sphi 0, %s74
    %s76 = sphi 0, %s74
    %s77 = sphi 0, %s76
    %s91 = sphi 0, %s77
    %s95 = sphi 0, %s95
    %s97 = sphi 0, %s95
    %s98 = sphi 0, %s97
    %s112 = sphi 0, %s98
    %s116 = sphi 0, %s116
    %s118 = sphi 0, %s116
    %s119 = sphi 0, %s118
    %s133 = sphi 0, %s119
    %s137 = sphi 0, %s137
    %s139 = sphi 0, %s137
    %s140 = sphi 0, %s139
    %s154 = sphi 0, %s140
    %s158 = sphi 0, %s158
    %s160 = sphi 0, %s158
    %s161 = sphi 0, %s160
    %s175 = sphi 0, %s161
    %s179 = sphi 0, %s179
    %s181 = sphi 0, %s179
    %s182 = sphi 0, %s181
    %s196 = sphi 0, %s182
    %s200 = sphi 0, %s200
    %s202 = sphi 0, %s200
    %s203 = sphi 0, %s202
    %s217 = sphi 0, %s203
    %s221 = sphi 0, %s221
    %s223 = sphi 0, %s221
    %s224 = sphi 0, %s223
    %s238 = sphi 0, %s224
    %s242 = sphi 0, %s242
    %s244 = sphi 0, %s242
    %s245 = sphi 0, %s244
    %s259 = sphi 0, %s245
    %s265 = sphi 0, %s267
    %s268 = sphi 0, %s265
    %s269 = sphi 0, %s268
    %s285 = sphi 0, %s269
    %s291 = sphi 0, %s293
    %s294 = sphi 0, %s291
    %s295 = sphi 0, %s294
    %s311 = sphi 0, %s295
  $region4: #{unet_conv_block.1} parent=0 // loop_header_branch
    %22 = sbr.rel (%p20) target = $region8
  $region5: #{unet_conv_block.1} parent=0 // loop_body
    %s24 = ssub.s32 %s19, 1
    %s25 = ssub.s32 %s19, 2
    %s26 = sadd.s32 %s19, 1
    %s27 = ssub.s32 %s19, %s26
    %p28 = scmp.eq.s32.totalorder %s27, 0
    %s30 = sadd.s32 %s29, 1
    %s31 = scalar_select %p28, %s29, %s30
    %p34 = pneg %p28
    %p35 = scmp.eq.s32.totalorder %s19, 1
    %p36 = por %p34, %p35
    %p37 = scmp.ne.s32.totalorder %s29, %s32
    %p38 = scmp.eq.s32.totalorder %s19, 0
    %p39 = por %p37, %p38
    %p40 = scmp.ne.s32.totalorder %s29, %s32
    %p41 = scmp.eq.s32.totalorder %s24, 1
    %p42 = por %p40, %p41
    %p43 = scmp.ne.s32.totalorder %s32, %s33
    %p44 = scmp.eq.s32.totalorder %s24, 0
    %p45 = por %p43, %p44
    %p46 = scmp.ne.s32.totalorder %s32, %s33
    %p47 = scmp.eq.s32.totalorder %s25, 1
    %p48 = por %p46, %p47
    %p50 = scmp.ne.s32.totalorder %s33, %s49
    %p51 = scmp.eq.s32.totalorder %s25, 0
    %p52 = por %p50, %p51
    %s54 = sadd.s32 %s53, 1
    %p57 = scmp.eq.s32.totalorder %s19, 1
    %p58 = scmp.ne.s32.totalorder %s53, %s55
    %p59 = scmp.eq.s32.totalorder %s19, 0
    %p60 = por %p58, %p59
    %p61 = scmp.ne.s32.totalorder %s53, %s55
    %p62 = scmp.eq.s32.totalorder %s24, 1
    %p63 = por %p61, %p62
    %p64 = scmp.ne.s32.totalorder %s55, %s56
    %p65 = scmp.eq.s32.totalorder %s24, 0
    %p66 = por %p64, %p65
    %p67 = scmp.ne.s32.totalorder %s55, %s56
    %p68 = scmp.eq.s32.totalorder %s25, 1
    %p69 = por %p67, %p68
    %p71 = scmp.ne.s32.totalorder %s56, %s70
    %p72 = scmp.eq.s32.totalorder %s25, 0
    %p73 = por %p71, %p72
    %s75 = sadd.s32 %s74, 1
    %p78 = scmp.eq.s32.totalorder %s19, 1
    %p79 = scmp.ne.s32.totalorder %s74, %s76
    %p80 = scmp.eq.s32.totalorder %s19, 0
    %p81 = por %p79, %p80
    %p82 = scmp.ne.s32.totalorder %s74, %s76
    %p83 = scmp.eq.s32.totalorder %s24, 1
    %p84 = por %p82, %p83
    %p85 = scmp.ne.s32.totalorder %s76, %s77
    %p86 = scmp.eq.s32.totalorder %s24, 0
    %p87 = por %p85, %p86
    %p88 = scmp.ne.s32.totalorder %s76, %s77
    %p89 = scmp.eq.s32.totalorder %s25, 1
    %p90 = por %p88, %p89
    %p92 = scmp.ne.s32.totalorder %s77, %s91
    %p93 = scmp.eq.s32.totalorder %s25, 0
    %p94 = por %p92, %p93
    %s96 = sadd.s32 %s95, 1
    %p99 = scmp.eq.s32.totalorder %s19, 1
    %p100 = scmp.ne.s32.totalorder %s95, %s97
    %p101 = scmp.eq.s32.totalorder %s19, 0
    %p102 = por %p100, %p101
    %p103 = scmp.ne.s32.totalorder %s95, %s97
    %p104 = scmp.eq.s32.totalorder %s24, 1
    %p105 = por %p103, %p104
    %p106 = scmp.ne.s32.totalorder %s97, %s98
    %p107 = scmp.eq.s32.totalorder %s24, 0
    %p108 = por %p106, %p107
    %p109 = scmp.ne.s32.totalorder %s97, %s98
    %p110 = scmp.eq.s32.totalorder %s25, 1
    %p111 = por %p109, %p110
    %p113 = scmp.ne.s32.totalorder %s98, %s112
    %p114 = scmp.eq.s32.totalorder %s25, 0
    %p115 = por %p113, %p114
    %s117 = sadd.s32 %s116, 1
    %p120 = scmp.eq.s32.totalorder %s19, 1
    %p121 = scmp.ne.s32.totalorder %s116, %s118
    %p122 = scmp.eq.s32.totalorder %s19, 0
    %p123 = por %p121, %p122
    %p124 = scmp.ne.s32.totalorder %s116, %s118
    %p125 = scmp.eq.s32.totalorder %s24, 1
    %p126 = por %p124, %p125
    %p127 = scmp.ne.s32.totalorder %s118, %s119
    %p128 = scmp.eq.s32.totalorder %s24, 0
    %p129 = por %p127, %p128
    %p130 = scmp.ne.s32.totalorder %s118, %s119
    %p131 = scmp.eq.s32.totalorder %s25, 1
    %p132 = por %p130, %p131
    %p134 = scmp.ne.s32.totalorder %s119, %s133
    %p135 = scmp.eq.s32.totalorder %s25, 0
    %p136 = por %p134, %p135
    %s138 = sadd.s32 %s137, 1
    %p141 = scmp.eq.s32.totalorder %s19, 1
    %p142 = scmp.ne.s32.totalorder %s137, %s139
    %p143 = scmp.eq.s32.totalorder %s19, 0
    %p144 = por %p142, %p143
    %p145 = scmp.ne.s32.totalorder %s137, %s139
    %p146 = scmp.eq.s32.totalorder %s24, 1
    %p147 = por %p145, %p146
    %p148 = scmp.ne.s32.totalorder %s139, %s140
    %p149 = scmp.eq.s32.totalorder %s24, 0
    %p150 = por %p148, %p149
    %p151 = scmp.ne.s32.totalorder %s139, %s140
    %p152 = scmp.eq.s32.totalorder %s25, 1
    %p153 = por %p151, %p152
    %p155 = scmp.ne.s32.totalorder %s140, %s154
    %p156 = scmp.eq.s32.totalorder %s25, 0
    %p157 = por %p155, %p156
    %s159 = sadd.s32 %s158, 1
    %p162 = scmp.eq.s32.totalorder %s19, 1
    %p163 = scmp.ne.s32.totalorder %s158, %s160
    %p164 = scmp.eq.s32.totalorder %s19, 0
    %p165 = por %p163, %p164
    %p166 = scmp.ne.s32.totalorder %s158, %s160
    %p167 = scmp.eq.s32.totalorder %s24, 1
    %p168 = por %p166, %p167
    %p169 = scmp.ne.s32.totalorder %s160, %s161
    %p170 = scmp.eq.s32.totalorder %s24, 0
    %p171 = por %p169, %p170
    %p172 = scmp.ne.s32.totalorder %s160, %s161
    %p173 = scmp.eq.s32.totalorder %s25, 1
    %p174 = por %p172, %p173
    %p176 = scmp.ne.s32.totalorder %s161, %s175
    %p177 = scmp.eq.s32.totalorder %s25, 0
    %p178 = por %p176, %p177
    %s180 = sadd.s32 %s179, 1
    %p183 = scmp.eq.s32.totalorder %s19, 1
    %p184 = scmp.ne.s32.totalorder %s179, %s181
    %p185 = scmp.eq.s32.totalorder %s19, 0
    %p186 = por %p184, %p185
    %p187 = scmp.ne.s32.totalorder %s179, %s181
    %p188 = scmp.eq.s32.totalorder %s24, 1
    %p189 = por %p187, %p188
    %p190 = scmp.ne.s32.totalorder %s181, %s182
    %p191 = scmp.eq.s32.totalorder %s24, 0
    %p192 = por %p190, %p191
    %p193 = scmp.ne.s32.totalorder %s181, %s182
    %p194 = scmp.eq.s32.totalorder %s25, 1
    %p195 = por %p193, %p194
    %p197 = scmp.ne.s32.totalorder %s182, %s196
    %p198 = scmp.eq.s32.totalorder %s25, 0
    %p199 = por %p197, %p198
    %s201 = sadd.s32 %s200, 1
    %p204 = scmp.eq.s32.totalorder %s19, 1
    %p205 = scmp.ne.s32.totalorder %s200, %s202
    %p206 = scmp.eq.s32.totalorder %s19, 0
    %p207 = por %p205, %p206
    %p208 = scmp.ne.s32.totalorder %s200, %s202
    %p209 = scmp.eq.s32.totalorder %s24, 1
    %p210 = por %p208, %p209
    %p211 = scmp.ne.s32.totalorder %s202, %s203
    %p212 = scmp.eq.s32.totalorder %s24, 0
    %p213 = por %p211, %p212
    %p214 = scmp.ne.s32.totalorder %s202, %s203
    %p215 = scmp.eq.s32.totalorder %s25, 1
    %p216 = por %p214, %p215
    %p218 = scmp.ne.s32.totalorder %s203, %s217
    %p219 = scmp.eq.s32.totalorder %s25, 0
    %p220 = por %p218, %p219
    %s222 = sadd.s32 %s221, 1
    %p225 = scmp.eq.s32.totalorder %s19, 1
    %p226 = scmp.ne.s32.totalorder %s221, %s223
    %p227 = scmp.eq.s32.totalorder %s19, 0
    %p228 = por %p226, %p227
    %p229 = scmp.ne.s32.totalorder %s221, %s223
    %p230 = scmp.eq.s32.totalorder %s24, 1
    %p231 = por %p229, %p230
    %p232 = scmp.ne.s32.totalorder %s223, %s224
    %p233 = scmp.eq.s32.totalorder %s24, 0
    %p234 = por %p232, %p233
    %p235 = scmp.ne.s32.totalorder %s223, %s224
    %p236 = scmp.eq.s32.totalorder %s25, 1
    %p237 = por %p235, %p236
    %p239 = scmp.ne.s32.totalorder %s224, %s238
    %p240 = scmp.eq.s32.totalorder %s25, 0
    %p241 = por %p239, %p240
    %s243 = sadd.s32 %s242, 1
    %p246 = scmp.eq.s32.totalorder %s19, 1
    %p247 = scmp.ne.s32.totalorder %s242, %s244
    %p248 = scmp.eq.s32.totalorder %s19, 0
    %p249 = por %p247, %p248
    %p250 = scmp.ne.s32.totalorder %s242, %s244
    %p251 = scmp.eq.s32.totalorder %s24, 1
    %p252 = por %p250, %p251
    %p253 = scmp.ne.s32.totalorder %s244, %s245
    %p254 = scmp.eq.s32.totalorder %s24, 0
    %p255 = por %p253, %p254
    %p256 = scmp.ne.s32.totalorder %s244, %s245
    %p257 = scmp.eq.s32.totalorder %s25, 1
    %p258 = por %p256, %p257
    %p260 = scmp.ne.s32.totalorder %s245, %s259
    %p261 = scmp.eq.s32.totalorder %s25, 0
    %p262 = por %p260, %p261
    %s263 = ssub.s32 %s19, %s26
    %p264 = scmp.eq.s32.totalorder %s263, 0
    %s266 = sadd.s32 %s265, 1
    %s267 = scalar_select %p264, %s265, %s266
    %p270 = pneg %p264
    %p271 = scmp.eq.s32.totalorder %s19, 1
    %p272 = por %p270, %p271
    %p273 = scmp.ne.s32.totalorder %s265, %s268
    %p274 = scmp.eq.s32.totalorder %s19, 0
    %p275 = por %p273, %p274
    %p276 = scmp.ne.s32.totalorder %s265, %s268
    %p277 = scmp.eq.s32.totalorder %s24, 1
    %p278 = por %p276, %p277
    %p279 = scmp.ne.s32.totalorder %s268, %s269
    %p280 = scmp.eq.s32.totalorder %s24, 0
    %p281 = por %p279, %p280
    %p282 = scmp.ne.s32.totalorder %s268, %s269
    %p283 = scmp.eq.s32.totalorder %s25, 1
    %p284 = por %p282, %p283
    %p286 = scmp.ne.s32.totalorder %s269, %s285
    %p287 = scmp.eq.s32.totalorder %s25, 0
    %p288 = por %p286, %p287
    %s289 = ssub.s32 %s19, %s26
    %p290 = scmp.eq.s32.totalorder %s289, 0
    %s292 = sadd.s32 %s291, 1
    %s293 = scalar_select %p290, %s291, %s292
    %p296 = pneg %p290
    %p297 = scmp.eq.s32.totalorder %s19, 1
    %p298 = por %p296, %p297
    %p299 = scmp.ne.s32.totalorder %s291, %s294
    %p300 = scmp.eq.s32.totalorder %s19, 0
    %p301 = por %p299, %p300
    %p302 = scmp.ne.s32.totalorder %s291, %s294
    %p303 = scmp.eq.s32.totalorder %s24, 1
    %p304 = por %p302, %p303
    %p305 = scmp.ne.s32.totalorder %s294, %s295
    %p306 = scmp.eq.s32.totalorder %s24, 0
    %p307 = por %p305, %p306
    %p308 = scmp.ne.s32.totalorder %s294, %s295
    %p309 = scmp.eq.s32.totalorder %s25, 1
    %p310 = por %p308, %p309
    %p312 = scmp.ne.s32.totalorder %s295, %s311
    %p313 = scmp.eq.s32.totalorder %s25, 0
    %p314 = por %p312, %p313
    %p315 = scmp.le.s32.totalorder 1, %s19
    %p316 = scmp.lt.s32.totalorder %s19, 3
    %p317 = pnand %p315, %p316
    %p318 = pneg %p317
    // Predicated region
    $region9: #{unet_conv_block.1} parent=5 // pred_check
      _
    $region10: #{unet_conv_block.1} parent=5 // pred_check_branch
      %320 = sbr.rel (%p317) target = $region12
    $region11: #{unet_conv_block.1} parent=5 // pred_region
      %s321 = ssub.s32 %s19, 1
      // Predicated region
      $region13: #{unet_conv_block.1} parent=11 // pred_check
        %p322 = pneg %p66
      $region14: #{unet_conv_block.1} parent=11 // pred_check_branch
        %324 = sbr.rel (%p322) target = $region16
      $region15: #{unet_conv_block.1} parent=11 // pred_region
        _
      $region16: #{unet_conv_block.1} parent=11 // pred_fallthru
        _
      // Predicated region
      $region17: #{unet_conv_block.1} parent=11 // pred_check
        %p325 = pneg %p87
      $region18: #{unet_conv_block.1} parent=11 // pred_check_branch
        %327 = sbr.rel (%p325) target = $region20
      $region19: #{unet_conv_block.1} parent=11 // pred_region
        _
      $region20: #{unet_conv_block.1} parent=11 // pred_fallthru
        _
      // Predicated region
      $region21: #{unet_conv_block.1} parent=11 // pred_check
        %p328 = pneg %p108
      $region22: #{unet_conv_block.1} parent=11 // pred_check_branch
        %330 = sbr.rel (%p328) target = $region24
      $region23: #{unet_conv_block.1} parent=11 // pred_region
        _
      $region24: #{unet_conv_block.1} parent=11 // pred_fallthru
        _
      // Predicated region
      $region25: #{unet_conv_block.1} parent=11 // pred_check
        %p331 = pneg %p129
      $region26: #{unet_conv_block.1} parent=11 // pred_check_branch
        %333 = sbr.rel (%p331) target = $region28
      $region27: #{unet_conv_block.1} parent=11 // pred_region
        _
      $region28: #{unet_conv_block.1} parent=11 // pred_fallthru
        _
      // Predicated region
      $region29: #{unet_conv_block.1} parent=11 // pred_check
        %p334 = pneg %p150
      $region30: #{unet_conv_block.1} parent=11 // pred_check_branch
        %336 = sbr.rel (%p334) target = $region32
      $region31: #{unet_conv_block.1} parent=11 // pred_region
        _
      $region32: #{unet_conv_block.1} parent=11 // pred_fallthru
        _
      // Predicated region
      $region33: #{unet_conv_block.1} parent=11 // pred_check
        %p337 = pneg %p171
      $region34: #{unet_conv_block.1} parent=11 // pred_check_branch
        %339 = sbr.rel (%p337) target = $region36
      $region35: #{unet_conv_block.1} parent=11 // pred_region
        _
      $region36: #{unet_conv_block.1} parent=11 // pred_fallthru
        _
      // Predicated region
      $region37: #{unet_conv_block.1} parent=11 // pred_check
        %p340 = pneg %p192
      $region38: #{unet_conv_block.1} parent=11 // pred_check_branch
        %342 = sbr.rel (%p340) target = $region40
      $region39: #{unet_conv_block.1} parent=11 // pred_region
        _
      $region40: #{unet_conv_block.1} parent=11 // pred_fallthru
        _
      // Predicated region
      $region41: #{unet_conv_block.1} parent=11 // pred_check
        %p343 = pneg %p213
      $region42: #{unet_conv_block.1} parent=11 // pred_check_branch
        %345 = sbr.rel (%p343) target = $region44
      $region43: #{unet_conv_block.1} parent=11 // pred_region
        _
      $region44: #{unet_conv_block.1} parent=11 // pred_fallthru
        _
      // Predicated region
      $region45: #{unet_conv_block.1} parent=11 // pred_check
        %p346 = pneg %p234
      $region46: #{unet_conv_block.1} parent=11 // pred_check_branch
        %348 = sbr.rel (%p346) target = $region48
      $region47: #{unet_conv_block.1} parent=11 // pred_region
        _
      $region48: #{unet_conv_block.1} parent=11 // pred_fallthru
        _
      // Predicated region
      $region49: #{unet_conv_block.1} parent=11 // pred_check
        %p349 = pneg %p255
      $region50: #{unet_conv_block.1} parent=11 // pred_check_branch
        %351 = sbr.rel (%p349) target = $region52
      $region51: #{unet_conv_block.1} parent=11 // pred_region
        _
      $region52: #{unet_conv_block.1} parent=11 // pred_fallthru
        _
    $region12: #{unet_conv_block.1} parent=5 // pred_fallthru
      _
    %p352 = scmp.lt.s32.totalorder %s19, 2
    // Predicated region
    $region53: #{unet_conv_block.1} parent=5 // pred_check
      %p353 = pneg %p352
    $region54: #{unet_conv_block.1} parent=5 // pred_check_branch
      %355 = sbr.rel (%p353) target = $region56
    $region55: #{unet_conv_block.1} parent=5 // pred_region
      // Predicated region
      $region57: #{unet_conv_block.1} parent=55 // pred_check
        %p356 = pneg %p39
      $region58: #{unet_conv_block.1} parent=55 // pred_check_branch
        %358 = sbr.rel (%p356) target = $region60
      $region59: #{unet_conv_block.1} parent=55 // pred_region
        %p359 = scmp.lt.s32.totalorder %s19, 1
        %s360 = scalar_select %p359, %s19, 1
        %s361 = smul.addr %s360, 2
        %s362 = smul.addr %s361, 4
        %s363 = scalar_lea.vmem %s0, %s362
      $region60: #{unet_conv_block.1} parent=55 // pred_fallthru
        _
    $region56: #{unet_conv_block.1} parent=5 // pred_fallthru
      _
    %p364 = scmp.le.s32.totalorder 1, %s19
    %p365 = scmp.lt.s32.totalorder %s19, 3
    %p366 = pnand %p364, %p365
    %p367 = pneg %p366
    // Predicated region
    $region61: #{unet_conv_block.1} parent=5 // pred_check
      _
    $region62: #{unet_conv_block.1} parent=5 // pred_check_branch
      %369 = sbr.rel (%p366) target = $region64
    $region63: #{unet_conv_block.1} parent=5 // pred_region
      %s370 = ssub.s32 %s19, 1
      %p371 = scmp.lt.s32.totalorder %s24, 1
      %s372 = scalar_select %p371, %s24, 1
      %s373 = smul.addr %s372, 2
      %s374 = smul.addr %s373, 4
      %s375 = scalar_lea.vmem %s0, %s374
      %p376 = pneg %p45
      %p377 = pneg %p42
      %p378 = pneg %p66
      %p379 = pneg %p63
      %p380 = pneg %p87
      %p381 = pneg %p84
      %p382 = pneg %p108
      %p383 = pneg %p105
      %p384 = pneg %p129
      %p385 = pneg %p126
      %p386 = pneg %p150
      %p387 = pneg %p147
      %p388 = pneg %p171
      %p389 = pneg %p168
      %p390 = pneg %p192
      %p391 = pneg %p189
      %p392 = pneg %p213
      %p393 = pneg %p210
      %p394 = pneg %p234
      %p395 = pneg %p231
      %p396 = pneg %p255
      %p397 = pneg %p252
      %p398 = pneg %p281
      %p399 = pneg %p278
      %p400 = scmp.lt.s32.totalorder %s24, 1
      %s401 = scalar_select %p400, %s24, 1
      %s402 = smul.addr %s401, 2
      %s403 = smul.addr %s402, 8
      %s404 = scalar_lea.vmem %s11, %s403
      %p405 = pneg %p307
      %p406 = pneg %p304
      %p407 = scmp.lt.s32.totalorder %s24, 1
      %s408 = scalar_select %p407, %s24, 1
      %s409 = smul.addr %s408, 4
      %s410 = scalar_lea.vmem %s12, %s409
      %p411 = scmp.lt.s32.totalorder %s24, 1
      %s412 = scalar_select %p411, %s24, 1
      %s413 = smul.addr %s412, 2
      %s414 = smul.addr %s413, 4
      %s415 = scalar_lea.vmem %s0, %s414
      %p416 = scmp.lt.s32.totalorder %s24, 1
      %s417 = scalar_select %p416, %s24, 1
      %s418 = smul.addr %s417, 2
      %s419 = smul.addr %s418, 8
      %s420 = scalar_lea.vmem %s11, %s419
      %p421 = scmp.lt.s32.totalorder %s24, 1
      %s422 = scalar_select %p421, %s24, 1
      %s423 = smul.addr %s422, 4
      %s424 = scalar_lea.vmem %s12, %s423
      %v425 = vld [vmem:[%s1] sm:$0xff]
      %v426 = vld [vmem:[%s5] sm:$0xff]
      %v427 = vld [vmem:[%s5 + $0x8] sm:$0xff]
      %v428 = vld [vmem:[%s6] sm:$0xf]
      %v429 = vld [vmem:[%s7] sm:$0xf]
      %v430 = vld [vmem:[%s10] sm:$0xff]
      %v431 = vld [vmem:[%s10 + $0x8] sm:$0xff]
      %v432 = vld [vmem:[%s10 + $0x10] sm:$0xff]
      %v433 = vld [vmem:[%s10 + $0x18] sm:$0xff]
      %v434 = vld [vmem:[%s10 + $0x20] sm:$0xff]
      %v435 = vld [vmem:[%s10 + $0x28] sm:$0xff]
      %v436 = vld [vmem:[%s10 + $0x30] sm:$0xff]
      %v437 = vld [vmem:[%s10 + $0x38] sm:$0xff]
      %v438 = vld [vmem:[%s10 + $0x40] sm:$0xff]
      %v439 = vld [vmem:[%s10 + $0x48] sm:$0xff]
      %v440 = vld [vmem:[%s10 + $0x50] sm:$0xff]
      %v441 = vld [vmem:[%s10 + $0x58] sm:$0xff]
      %v442 = vld [vmem:[%s10 + $0x60] sm:$0xff]
      %v443 = vld [vmem:[%s10 + $0x68] sm:$0xff]
      %v444 = vld [vmem:[%s10 + $0x70] sm:$0xff]
      %v445 = vld [vmem:[%s10 + $0x78] sm:$0xff]
      %v446 = vld [vmem:[%s10 + $0x80] sm:$0xff]
      %v447 = vld [vmem:[%s10 + $0x88] sm:$0xff]
      %v448 = vld [vmem:[%s10 + $0x90] sm:$0xff]
      %v449 = vld [vmem:[%s10 + $0x98] sm:$0xff]
      %v450 = vld [vmem:[%s10 + $0xa0] sm:$0xff]
      %v451 = vld [vmem:[%s10 + $0xa8] sm:$0xff]
      %v452 = vld [vmem:[%s10 + $0xb0] sm:$0xff]
      %v453 = vld [vmem:[%s10 + $0xb8] sm:$0xff]
      %v454 = vld [vmem:[%s10 + $0xc0] sm:$0xff]
      %v455 = vld [vmem:[%s10 + $0xc8] sm:$0xff]
      %v456 = vld [vmem:[%s10 + $0xd0] sm:$0xff]
      %v457 = vld [vmem:[%s10 + $0xd8] sm:$0xff]
      %v458 = vld [vmem:[%s10 + $0xe0] sm:$0xff]
      %v459 = vld [vmem:[%s10 + $0xe8] sm:$0xff]
      %v460 = vld [vmem:[%s10 + $0xf0] sm:$0xff]
      %v461 = vld [vmem:[%s10 + $0xf8] sm:$0xff]
      %v462 = vld [vmem:[%s2] sm:$0xff]
      %v463 = vld [vmem:[%s3] sm:$0xff]
      %v464 = vld [vmem:[%s4] sm:$0xff]
      %v465 = vlaneseq
      %vm466 = vcmp.ge.s32.totalorder %v465, 0
      %vm467 = vcmp.lt.s32.totalorder %v465, 256
      %vm468 = vmand %vm466, %vm467
      %s469 = scalar_lea.vmem [#allocation2], 68
      %470 = vst.msk [vmem:[%s469] ss:$8 sm:$0x3] %vm468, 1.0
      %471 = vst.msk [vmem:[%s469] ss:$8 sm:$0x0] %vm468, 1.0
      %s472 = scalar_lea.vmem [#allocation3], 148
      %473 = vst.msk [vmem:[%s472] ss:$8 sm:$0x3] %vm468, 1.0
      %474 = vst.msk [vmem:[%s472] ss:$8 sm:$0x0] %vm468, 1.0
      %v475 = vld [vmem:[%s415] sm:$0xff]
      %477 = vst [vmem:[#allocation1] ss:$2 sm:$0xff] %v475
      %v478 = vld.sshfl [vmem:[#allocation1] sm:$0xff pattern:$0x75316420]
      %v479 = vld.sshfl [vmem:[#allocation1 + $0x8] sm:$0xff pattern:$0x75316420]
      %482 = vrot.lane.b32.xlu0 %v478, 17
      %v483 = vpop.permute.xlu0 %482
      %484 = vrot.lane.b32.xlu0 %v479, 17
      %v485 = vpop.permute.xlu0 %484
      %v486 = vlaneseq
      %v487 = vand.u32 %v486, 127
      %vm488 = vcmp.lt.s32.totalorder %v487, 17
      %v489 = vsel %vm488, %v483, %v485
      %v490 = vsel %vm488, %v485, %v483
      %v491 = vld [vmem:[%s8] ss:$8 sm:$0x3]
      %v493 = vperm.slane %v491, 0
      %v494 = vperm.slane %v491, 1
      %v497 = vmul.f32 %v490, %v493
      %v498 = vmul.f32 %v489, %v494
      %499 = vst [vmem:[#allocation2] sm:$0xf] %v497
      %500 = vst [vmem:[#allocation2 + $0x8] sm:$0xf] %v498
      %501 = vst [vmem:[#allocation1] ss:$2 sm:$0xff] %v475
      %v502 = vld.sshfl [vmem:[#allocation1] sm:$0xff pattern:$0x75316420]
      %v503 = vld.sshfl [vmem:[#allocation1 + $0x8] sm:$0xff pattern:$0x75316420]
      %506 = vrot.lane.b32.xlu0 %v502, 16
      %v507 = vpop.permute.xlu0 %506
      %508 = vrot.lane.b32.xlu0 %v503, 16
      %v509 = vpop.permute.xlu0 %508
      %vm510 = vcmp.lt.s32.totalorder %v487, 16
      %v511 = vsel %vm510, %v507, %v509
      %v512 = vsel %vm510, %v509, %v507
      %s513 = scalar_lea.vmem %s8, 1
      %v514 = vld [vmem:[%s513] ss:$8 sm:$0x3]
      %v516 = vperm.slane %v514, 0
      %v517 = vperm.slane %v514, 1
      %v520 = vmul.f32 %v512, %v516
      %v521 = vmul.f32 %v511, %v517
      %v524 = vrot.slane %v520, 4
      %v525 = vrot.slane %v521, 4
      %528 = vst [vmem:[#allocation2] sm:$0xf0] %v524
      %529 = vst [vmem:[#allocation2 + $0x8] sm:$0xf0] %v525
      %530 = vst [vmem:[#allocation1] ss:$2 sm:$0xff] %v475
      %v531 = vld.sshfl [vmem:[#allocation1] sm:$0xff pattern:$0x75316420]
      %v532 = vld.sshfl [vmem:[#allocation1 + $0x8] sm:$0xff pattern:$0x75316420]
      %535 = vrot.lane.b32.xlu0 %v531, 15
      %v536 = vpop.permute.xlu0 %535
      %537 = vrot.lane.b32.xlu0 %v532, 15
      %v538 = vpop.permute.xlu0 %537
      %vm539 = vcmp.lt.s32.totalorder %v487, 15
      %v540 = vsel %vm539, %v536, %v538
      %v541 = vsel %vm539, %v538, %v536
      %s542 = scalar_lea.vmem %s8, 2
      %v543 = vld [vmem:[%s542] ss:$8 sm:$0x3]
      %v545 = vperm.slane %v543, 0
      %v546 = vperm.slane %v543, 1
      %v549 = vmul.f32 %v541, %v545
      %v550 = vmul.f32 %v540, %v546
      %551 = vst [vmem:[#allocation2 + $0x10] sm:$0xf] %v549
      %552 = vst [vmem:[#allocation2 + $0x18] sm:$0xf] %v550
      %553 = vst [vmem:[#allocation1] ss:$2 sm:$0xff] %v475
      %v554 = vld.sshfl [vmem:[#allocation1] sm:$0xff pattern:$0x75316420]
      %v555 = vld.sshfl [vmem:[#allocation1 + $0x8] sm:$0xff pattern:$0x75316420]
      %558 = vrot.lane.b32.xlu0 %v554, 1
      %v559 = vpop.permute.xlu0 %558
      %560 = vrot.lane.b32.xlu0 %v555, 1
      %v561 = vpop.permute.xlu0 %560
      %vm562 = vcmp.lt.s32.totalorder %v487, 1
      %v563 = vsel %vm562, %v559, %v561
      %v564 = vsel %vm562, %v561, %v559
      %s565 = scalar_lea.vmem %s8, 3
      %v566 = vld [vmem:[%s565] ss:$8 sm:$0x3]
      %v568 = vperm.slane %v566, 0
      %v569 = vperm.slane %v566, 1
      %v572 = vmul.f32 %v564, %v568
      %v573 = vmul.f32 %v563, %v569
      %v576 = vrot.slane %v572, 4
      %v577 = vrot.slane %v573, 4
      %580 = vst [vmem:[#allocation2 + $0x10] sm:$0xf0] %v576
      %581 = vst [vmem:[#allocation2 + $0x18] sm:$0xf0] %v577
      %582 = vst [vmem:[#allocation1] ss:$2 sm:$0xff] %v475
      %v583 = vld.sshfl [vmem:[#allocation1] sm:$0xff pattern:$0x75316420]
      %v584 = vld.sshfl [vmem:[#allocation1 + $0x8] sm:$0xff pattern:$0x75316420]
      %587 = vst [vmem:[#allocation2 + $0x20] sm:$0xf] %v583
      %588 = vst [vmem:[#allocation2 + $0x28] sm:$0xf] %v584
      %589 = vst [vmem:[#allocation1] ss:$2 sm:$0xff] %v475
      %v590 = vld.sshfl [vmem:[#allocation1] sm:$0xff pattern:$0x75316420]
      %v591 = vld.sshfl [vmem:[#allocation1 + $0x8] sm:$0xff pattern:$0x75316420]
      %594 = vrot.lane.b32.xlu0 %v590, 127
      %v595 = vpop.permute.xlu0 %594
      %596 = vrot.lane.b32.xlu0 %v591, 127
      %v597 = vpop.permute.xlu0 %596
      %vm598 = vcmp.lt.s32.totalorder %v487, 127
      %v599 = vsel %vm598, %v595, %v597
      %v600 = vsel %vm598, %v597, %v595
      %s601 = scalar_lea.vmem %s8, 5
      %v602 = vld [vmem:[%s601] ss:$8 sm:$0x3]
      %v604 = vperm.slane %v602, 0
      %v605 = vperm.slane %v602, 1
      %v608 = vmul.f32 %v599, %v604
      %v609 = vmul.f32 %v600, %v605
      %v612 = vrot.slane %v608, 4
      %v613 = vrot.slane %v609, 4
      %616 = vst [vmem:[#allocation2 + $0x20] sm:$0xf0] %v612
      %617 = vst [vmem:[#allocation2 + $0x28] sm:$0xf0] %v613
      %618 = vst [vmem:[#allocation1] ss:$2 sm:$0xff] %v475
      %v619 = vld.sshfl [vmem:[#allocation1] sm:$0xff pattern:$0x75316420]
      %v620 = vld.sshfl [vmem:[#allocation1 + $0x8] sm:$0xff pattern:$0x75316420]
      %623 = vrot.lane.b32.xlu0 %v619, 113
      %v624 = vpop.permute.xlu0 %623
      %625 = vrot.lane.b32.xlu0 %v620, 113
      %v626 = vpop.permute.xlu0 %625
      %vm627 = vcmp.lt.s32.totalorder %v487, 113
      %v628 = vsel %vm627, %v624, %v626
      %v629 = vsel %vm627, %v626, %v624
      %s630 = scalar_lea.vmem %s8, 6
      %v631 = vld [vmem:[%s630] ss:$8 sm:$0x3]
      %v633 = vperm.slane %v631, 0
      %v634 = vperm.slane %v631, 1
      %v637 = vmul.f32 %v628, %v633
      %v638 = vmul.f32 %v629, %v634
      %639 = vst [vmem:[#allocation2 + $0x30] sm:$0xf] %v637
      %640 = vst [vmem:[#allocation2 + $0x38] sm:$0xf] %v638
      %641 = vst [vmem:[#allocation1] ss:$2 sm:$0xff] %v475
      %v642 = vld.sshfl [vmem:[#allocation1] sm:$0xff pattern:$0x75316420]
      %v643 = vld.sshfl [vmem:[#allocation1 + $0x8] sm:$0xff pattern:$0x75316420]
      %646 = vrot.lane.b32.xlu0 %v642, 112
      %v647 = vpop.permute.xlu0 %646
      %648 = vrot.lane.b32.xlu0 %v643, 112
      %v649 = vpop.permute.xlu0 %648
      %vm650 = vcmp.lt.s32.totalorder %v487, 112
      %v651 = vsel %vm650, %v647, %v649
      %v652 = vsel %vm650, %v649, %v647
      %s653 = scalar_lea.vmem %s8, 7
      %v654 = vld [vmem:[%s653] ss:$8 sm:$0x3]
      %v656 = vperm.slane %v654, 0
      %v657 = vperm.slane %v654, 1
      %v660 = vmul.f32 %v651, %v656
      %v661 = vmul.f32 %v652, %v657
      %v664 = vrot.slane %v660, 4
      %v665 = vrot.slane %v661, 4
      %668 = vst [vmem:[#allocation2 + $0x30] sm:$0xf0] %v664
      %669 = vst [vmem:[#allocation2 + $0x38] sm:$0xf0] %v665
      %670 = vst [vmem:[#allocation1] ss:$2 sm:$0xff] %v475
      %v671 = vld.sshfl [vmem:[#allocation1] sm:$0xff pattern:$0x75316420]
      %v672 = vld.sshfl [vmem:[#allocation1 + $0x8] sm:$0xff pattern:$0x75316420]
      %675 = vrot.lane.b32.xlu0 %v671, 111
      %v676 = vpop.permute.xlu0 %675
      %677 = vrot.lane.b32.xlu0 %v672, 111
      %v678 = vpop.permute.xlu0 %677
      %vm679 = vcmp.lt.s32.totalorder %v487, 111
      %v680 = vsel %vm679, %v676, %v678
      %v681 = vsel %vm679, %v678, %v676
      %s682 = scalar_lea.vmem %s8, 16
      %v683 = vld [vmem:[%s682] ss:$8 sm:$0x3]
      %v685 = vperm.slane %v683, 0
      %v686 = vperm.slane %v683, 1
      %v689 = vmul.f32 %v680, %v685
      %v690 = vmul.f32 %v681, %v686
      %691 = vst [vmem:[#allocation2 + $0x40] sm:$0xf] %v689
      %692 = vst [vmem:[#allocation2 + $0x48] sm:$0xf] %v690
      %v693 = vld [vmem:[#allocation2] sm:$0xff]
      %v694 = vld [vmem:[#allocation2 + $0x8] sm:$0xff]
      %v695 = vld [vmem:[#allocation2 + $0x10] sm:$0xff]
      %v696 = vld [vmem:[#allocation2 + $0x18] sm:$0xff]
      %v697 = vld [vmem:[#allocation2 + $0x20] sm:$0xff]
      %v698 = vld [vmem:[#allocation2 + $0x28] sm:$0xff]
      %v699 = vld [vmem:[#allocation2 + $0x30] sm:$0xff]
      %v700 = vld [vmem:[#allocation2 + $0x38] sm:$0xff]
      %v701 = vld [vmem:[#allocation2 + $0x40] sm:$0x1f]
      %v702 = vld [vmem:[#allocation2 + $0x48] sm:$0x1f]
      %vm703 = vcmask 302080
      %v705 = vsel %vm703, %v425, 0
      %vm707 = vcmask 1044480
      %v709 = vsel %vm707, %v701, 0
      %v712 = vsel %vm707, %v702, 0
      %714 = vmatpush.msra.mxu0 0.0
      %715 = vmatpush.msra.mxu0 0.0
      %716 = vmatpush.msra.mxu0 0.0
      %717 = vmatpush.msra.mxu0 0.0
      %718 = vmatpush.msra.mxu0 0.0
      %719 = vmatpush.msra.mxu0 0.0
      %720 = vmatpush.msra.mxu0 0.0
      %721 = vmatpush.msra.mxu0 0.0
      %722 = vmatpush.msra.mxu0 0.0
      %723 = vmatpush.msra.mxu0 0.0
      %724 = vmatpush.msra.mxu0 0.0
      %725 = vmatpush.msra.mxu0 %v709
      %726 = vmatpush.msra.mxu0 %v699
      %727 = vmatpush.msra.mxu0 %v697
      %728 = vmatpush.msra.mxu0 %v695
      %729 = vmatpush.msra.mxu0 %v693
      %730 = vmatmul.f32.gmra.mxu0 %v705
      %v731 = vpop.f32.mrf.mxu0
      %v732 = vadd.f32 0.0, %v731
      %733 = vdwg.mxu0
      %734 = vmatpush.msra.mxu0 0.0
      %735 = vmatpush.msra.mxu0 0.0
      %736 = vmatpush.msra.mxu0 0.0
      %737 = vmatpush.msra.mxu0 0.0
      %738 = vmatpush.msra.mxu0 0.0
      %739 = vmatpush.msra.mxu0 0.0
      %740 = vmatpush.msra.mxu0 0.0
      %741 = vmatpush.msra.mxu0 0.0
      %742 = vmatpush.msra.mxu0 0.0
      %743 = vmatpush.msra.mxu0 0.0
      %744 = vmatpush.msra.mxu0 0.0
      %745 = vmatpush.msra.mxu0 %v712
      %746 = vmatpush.msra.mxu0 %v700
      %747 = vmatpush.msra.mxu0 %v698
      %748 = vmatpush.msra.mxu0 %v696
      %749 = vmatpush.msra.mxu0 %v694
      %750 = vmatmul.f32.gmra.mxu0 %v705
      %v751 = vpop.f32.mrf.mxu0
      %v752 = vadd.f32 0.0, %v751
      %753 = vdwg.mxu0
      %v754 = vadd.f32 %v732, %v752
      %755 = vadd.xlane.f32.xlu0 %v754
      %v756 = vpop.xlane.xlu0 %755
      %v757 = vrcp.pop 256.0
      %v758 = vmul.f32 256.0, %v757
      %v759 = vsub.f32 1.0, %v758
      %v760 = vmul.f32 %v757, %v759
      %v761 = vadd.f32 %v757, %v760
      %vm762 = vweird.f32 %v757
      %v763 = vsel %vm762, %v757, %v761
      %v764 = vmul.f32 %v756, %v763
      %v765 = vmul.f32 %v732, %v732
      %v766 = vmul.f32 %v752, %v752
      %v767 = vadd.f32 %v765, %v766
      %768 = vadd.xlane.f32.xlu0 %v767
      %v769 = vpop.xlane.xlu0 %768
      %v770 = vmul.f32 %v769, %v763
      %v771 = vmul.f32 %v764, %v764
      %v772 = vsub.f32 %v770, %v771
      %v773 = vmax.f32 %v772, 0.0
      %v774 = vadd.f32 %v773, 1e-05
      %v775 = vrsqrt.pop %v774
      %v776 = vmul.f32 %v775, %v774
      %v777 = vmul.f32 %v776, %v775
      %v778 = vmul.f32 0.5, %v777
      %v779 = vsub.f32 1.5, %v778
      %v780 = vmul.f32 %v775, %v779
      %vm781 = vweird.f32 %v774
      %vm782 = vweird.f32 %v775
      %vm783 = vmor %vm781, %vm782
      %v784 = vsel %vm783, %v775, %v780
      %v785 = vmul.f32 %v462, %v784
      %v786 = vadd.f32 %v464, %v785
      %788 = vset.pattern.permute.xlu0 0
      %789 = vperm.xlu0 %788, %v786
      %v790 = vpop.permute.xlu0 %789
      %v792 = vmul.f32 %v732, %v790
      %v793 = vmul.f32 %v752, %v790
      %v794 = vmul.f32 %v764, %v785
      %v795 = vsub.f32 %v463, %v794
      %797 = vset.pattern.permute.xlu0 0
      %798 = vperm.xlu0 %797, %v795
      %v799 = vpop.permute.xlu0 %798
      %v801 = vadd.f32 %v792, %v799
      %v802 = vadd.f32 %v793, %v799
      %v803 = vmul.f32 %v801, 0.2
      %v804 = vmul.f32 %v802, 0.2
      %v805 = vmax.f32 %v801, %v803
      %v806 = vmax.f32 %v802, %v804
      %807 = vrot.lane.b32.xlu0 %v805, 17
      %v808 = vpop.permute.xlu0 %807
      %809 = vrot.lane.b32.xlu0 %v806, 17
      %v810 = vpop.permute.xlu0 %809
      %v811 = vsel %vm488, %v808, %v810
      %v812 = vsel %vm488, %v810, %v808
      %v813 = vld [vmem:[%s8] ss:$8 sm:$0x3]
      %v815 = vperm.slane %v813, 0
      %v816 = vperm.slane %v813, 1
      %v819 = vmul.f32 %v812, %v815
      %v820 = vmul.f32 %v811, %v816
      %821 = vst [vmem:[#allocation3] sm:$0xff] %v819
      %822 = vst [vmem:[#allocation3 + $0x8] sm:$0xff] %v820
      %823 = vrot.lane.b32.xlu0 %v805, 16
      %v824 = vpop.permute.xlu0 %823
      %825 = vrot.lane.b32.xlu0 %v806, 16
      %v826 = vpop.permute.xlu0 %825
      %v827 = vsel %vm510, %v824, %v826
      %v828 = vsel %vm510, %v826, %v824
      %v829 = vld [vmem:[%s513] ss:$8 sm:$0x3]
      %v831 = vperm.slane %v829, 0
      %v832 = vperm.slane %v829, 1
      %v835 = vmul.f32 %v828, %v831
      %v836 = vmul.f32 %v827, %v832
      %837 = vst [vmem:[#allocation3 + $0x10] sm:$0xff] %v835
      %838 = vst [vmem:[#allocation3 + $0x18] sm:$0xff] %v836
      %839 = vrot.lane.b32.xlu0 %v805, 15
      %v840 = vpop.permute.xlu0 %839
      %841 = vrot.lane.b32.xlu0 %v806, 15
      %v842 = vpop.permute.xlu0 %841
      %v843 = vsel %vm539, %v840, %v842
      %v844 = vsel %vm539, %v842, %v840
      %v845 = vld [vmem:[%s542] ss:$8 sm:$0x3]
      %v847 = vperm.slane %v845, 0
      %v848 = vperm.slane %v845, 1
      %v851 = vmul.f32 %v844, %v847
      %v852 = vmul.f32 %v843, %v848
      %853 = vst [vmem:[#allocation3 + $0x20] sm:$0xff] %v851
      %854 = vst [vmem:[#allocation3 + $0x28] sm:$0xff] %v852
      %855 = vrot.lane.b32.xlu0 %v805, 1
      %v856 = vpop.permute.xlu0 %855
      %857 = vrot.lane.b32.xlu0 %v806, 1
      %v858 = vpop.permute.xlu0 %857
      %v859 = vsel %vm562, %v856, %v858
      %v860 = vsel %vm562, %v858, %v856
      %v861 = vld [vmem:[%s565] ss:$8 sm:$0x3]
      %v863 = vperm.slane %v861, 0
      %v864 = vperm.slane %v861, 1
      %v867 = vmul.f32 %v860, %v863
      %v868 = vmul.f32 %v859, %v864
      %869 = vst [vmem:[#allocation3 + $0x30] sm:$0xff] %v867
      %870 = vst [vmem:[#allocation3 + $0x38] sm:$0xff] %v868
      %871 = vst [vmem:[#allocation3 + $0x40] sm:$0xff] %v805
      %872 = vst [vmem:[#allocation3 + $0x48] sm:$0xff] %v806
      %873 = vrot.lane.b32.xlu0 %v805, 127
      %v874 = vpop.permute.xlu0 %873
      %875 = vrot.lane.b32.xlu0 %v806, 127
      %v876 = vpop.permute.xlu0 %875
      %v877 = vsel %vm598, %v874, %v876
      %v878 = vsel %vm598, %v876, %v874
      %v879 = vld [vmem:[%s601] ss:$8 sm:$0x3]
      %v881 = vperm.slane %v879, 0
      %v882 = vperm.slane %v879, 1
      %v885 = vmul.f32 %v877, %v881
      %v886 = vmul.f32 %v878, %v882
      %887 = vst [vmem:[#allocation3 + $0x50] sm:$0xff] %v885
      %888 = vst [vmem:[#allocation3 + $0x58] sm:$0xff] %v886
      %889 = vrot.lane.b32.xlu0 %v805, 113
      %v890 = vpop.permute.xlu0 %889
      %891 = vrot.lane.b32.xlu0 %v806, 113
      %v892 = vpop.permute.xlu0 %891
      %v893 = vsel %vm627, %v890, %v892
      %v894 = vsel %vm627, %v892, %v890
      %v895 = vld [vmem:[%s630] ss:$8 sm:$0x3]
      %v897 = vperm.slane %v895, 0
      %v898 = vperm.slane %v895, 1
      %v901 = vmul.f32 %v893, %v897
      %v902 = vmul.f32 %v894, %v898
      %903 = vst [vmem:[#allocation3 + $0x60] sm:$0xff] %v901
      %904 = vst [vmem:[#allocation3 + $0x68] sm:$0xff] %v902
      %905 = vrot.lane.b32.xlu0 %v805, 112
      %v906 = vpop.permute.xlu0 %905
      %907 = vrot.lane.b32.xlu0 %v806, 112
      %v908 = vpop.permute.xlu0 %907
      %v909 = vsel %vm650, %v906, %v908
      %v910 = vsel %vm650, %v908, %v906
      %v911 = vld [vmem:[%s653] ss:$8 sm:$0x3]
      %v913 = vperm.slane %v911, 0
      %v914 = vperm.slane %v911, 1
      %v917 = vmul.f32 %v909, %v913
      %v918 = vmul.f32 %v910, %v914
      %919 = vst [vmem:[#allocation3 + $0x70] sm:$0xff] %v917
      %920 = vst [vmem:[#allocation3 + $0x78] sm:$0xff] %v918
      %921 = vrot.lane.b32.xlu0 %v805, 111
      %v922 = vpop.permute.xlu0 %921
      %923 = vrot.lane.b32.xlu0 %v806, 111
      %v924 = vpop.permute.xlu0 %923
      %v925 = vsel %vm679, %v922, %v924
      %v926 = vsel %vm679, %v924, %v922
      %v927 = vld [vmem:[%s682] ss:$8 sm:$0x3]
      %v929 = vperm.slane %v927, 0
      %v930 = vperm.slane %v927, 1
      %v933 = vmul.f32 %v925, %v929
      %v934 = vmul.f32 %v926, %v930
      %935 = vst [vmem:[#allocation3 + $0x80] sm:$0xff] %v933
      %936 = vst [vmem:[#allocation3 + $0x88] sm:$0xff] %v934
      %937 = vst [vmem:[#allocation1] ss:$2 sm:$0xff] %v475
      %v938 = vld.sshfl [vmem:[#allocation1] sm:$0xff pattern:$0x75316420]
      %v939 = vld.sshfl [vmem:[#allocation1 + $0x8] sm:$0xff pattern:$0x75316420]
      %942 = vst [vmem:[#allocation3 + $0x90] sm:$0xf] %v938
      %943 = vst [vmem:[#allocation3 + $0x98] sm:$0xf] %v939
      %v944 = vld [vmem:[#allocation3] sm:$0xff]
      %v945 = vld [vmem:[#allocation3 + $0x8] sm:$0xff]
      %v946 = vld [vmem:[#allocation3 + $0x10] sm:$0xff]
      %v947 = vld [vmem:[#allocation3 + $0x18] sm:$0xff]
      %v948 = vld [vmem:[#allocation3 + $0x20] sm:$0xff]
      %v949 = vld [vmem:[#allocation3 + $0x28] sm:$0xff]
      %v950 = vld [vmem:[#allocation3 + $0x30] sm:$0xff]
      %v951 = vld [vmem:[#allocation3 + $0x38] sm:$0xff]
      %v952 = vld [vmem:[#allocation3 + $0x40] sm:$0xff]
      %v953 = vld [vmem:[#allocation3 + $0x48] sm:$0xff]
      %v954 = vld [vmem:[#allocation3 + $0x50] sm:$0xff]
      %v955 = vld [vmem:[#allocation3 + $0x58] sm:$0xff]
      %v956 = vld [vmem:[#allocation3 + $0x60] sm:$0xff]
      %v957 = vld [vmem:[#allocation3 + $0x68] sm:$0xff]
      %v958 = vld [vmem:[#allocation3 + $0x70] sm:$0xff]
      %v959 = vld [vmem:[#allocation3 + $0x78] sm:$0xff]
      %v960 = vld [vmem:[#allocation3 + $0x80] sm:$0xff]
      %v961 = vld [vmem:[#allocation3 + $0x88] sm:$0xff]
      %v962 = vld [vmem:[#allocation3 + $0x90] sm:$0x1f]
      %v963 = vld [vmem:[#allocation3 + $0x98] sm:$0x1f]
      %vm964 = vcmask 629760
      %v966 = vsel %vm964, %v426, 0
      %v969 = vsel %vm964, %v427, 0
      %v972 = vsel %vm707, %v962, 0
      %v975 = vsel %vm707, %v963, 0
      %977 = vmatpush.msra.mxu0 0.0
      %978 = vmatpush.msra.mxu0 0.0
      %979 = vmatpush.msra.mxu0 0.0
      %980 = vmatpush.msra.mxu0 0.0
      %981 = vmatpush.msra.mxu0 0.0
      %982 = vmatpush.msra.mxu0 0.0
      %983 = vmatpush.msra.mxu0 %v972
      %984 = vmatpush.msra.mxu0 %v960
      %985 = vmatpush.msra.mxu0 %v958
      %986 = vmatpush.msra.mxu0 %v956
      %987 = vmatpush.msra.mxu0 %v954
      %988 = vmatpush.msra.mxu0 %v952
      %989 = vmatpush.msra.mxu0 %v950
      %990 = vmatpush.msra.mxu0 %v948
      %991 = vmatpush.msra.mxu0 %v946
      %992 = vmatpush.msra.mxu0 %v944
      %993 = vmatmul.f32.gmra.mxu0 %v966
      %v994 = vpop.f32.mrf.mxu0
      %v995 = vadd.f32 0.0, %v994
      %996 = vmatmul.f32.gmra.mxu0 %v969
      %v997 = vpop.f32.mrf.mxu0
      %v998 = vadd.f32 0.0, %v997
      %999 = vdwg.mxu0
      %1000 = vmatpush.msra.mxu0 0.0
      %1001 = vmatpush.msra.mxu0 0.0
      %1002 = vmatpush.msra.mxu0 0.0
      %1003 = vmatpush.msra.mxu0 0.0
      %1004 = vmatpush.msra.mxu0 0.0
      %1005 = vmatpush.msra.mxu0 0.0
      %1006 = vmatpush.msra.mxu0 %v975
      %1007 = vmatpush.msra.mxu0 %v961
      %1008 = vmatpush.msra.mxu0 %v959
      %1009 = vmatpush.msra.mxu0 %v957
      %1010 = vmatpush.msra.mxu0 %v955
      %1011 = vmatpush.msra.mxu0 %v953
      %1012 = vmatpush.msra.mxu0 %v951
      %1013 = vmatpush.msra.mxu0 %v949
      %1014 = vmatpush.msra.mxu0 %v947
      %1015 = vmatpush.msra.mxu0 %v945
      %1016 = vmatmul.f32.gmra.mxu0 %v966
      %v1017 = vpop.f32.mrf.mxu0
      %v1018 = vadd.f32 0.0, %v1017
      %1019 = vmatmul.f32.gmra.mxu0 %v969
      %v1020 = vpop.f32.mrf.mxu0
      %v1021 = vadd.f32 0.0, %v1020
      %1022 = vdwg.mxu0
      %v1023 = vmul.f32 %v995, 0.2
      %v1024 = vmul.f32 %v1018, 0.2
      %v1025 = vmax.f32 %v995, %v1023
      %v1026 = vmax.f32 %v1018, %v1024
      %v1027 = vadd.f32 %v1025, %v998
      %v1028 = vadd.f32 %v1026, %v1021
      %1029 = vst [vmem:[%s420] sm:$0xff] %v1027
      %1030 = vst [vmem:[%s420 + $0x8] sm:$0xff] %v1028
      %1031 = vrot.lane.b32.xlu0 %v1027, 17
      %v1032 = vpop.permute.xlu0 %1031
      %1033 = vrot.lane.b32.xlu0 %v1028, 17
      %v1034 = vpop.permute.xlu0 %1033
      %v1035 = vsel %vm488, %v1032, %v1034
      %v1036 = vsel %vm488, %v1034, %v1032
      %v1037 = vld [vmem:[%s9] ss:$8 sm:$0x3]
      %v1039 = vperm.slane %v1037, 0
      %v1040 = vperm.slane %v1037, 1
      %v1043 = vmul.f32 %v1036, %v1039
      %v1044 = vmul.f32 %v1035, %v1040
      %1045 = vst [vmem:[#allocation4] sm:$0xff] %v1043
      %1046 = vst [vmem:[#allocation4 + $0x8] sm:$0xff] %v1044
      %1047 = vrot.lane.b32.xlu0 %v1027, 16
      %v1048 = vpop.permute.xlu0 %1047
      %1049 = vrot.lane.b32.xlu0 %v1028, 16
      %v1050 = vpop.permute.xlu0 %1049
      %v1051 = vsel %vm510, %v1048, %v1050
      %v1052 = vsel %vm510, %v1050, %v1048
      %s1053 = scalar_lea.vmem %s9, 1
      %v1054 = vld [vmem:[%s1053] ss:$8 sm:$0x3]
      %v1056 = vperm.slane %v1054, 0
      %v1057 = vperm.slane %v1054, 1
      %v1060 = vmul.f32 %v1052, %v1056
      %v1061 = vmul.f32 %v1051, %v1057
      %1062 = vst [vmem:[#allocation4 + $0x10] sm:$0xff] %v1060
      %1063 = vst [vmem:[#allocation4 + $0x18] sm:$0xff] %v1061
      %1064 = vrot.lane.b32.xlu0 %v1027, 15
      %v1065 = vpop.permute.xlu0 %1064
      %1066 = vrot.lane.b32.xlu0 %v1028, 15
      %v1067 = vpop.permute.xlu0 %1066
      %v1068 = vsel %vm539, %v1065, %v1067
      %v1069 = vsel %vm539, %v1067, %v1065
      %s1070 = scalar_lea.vmem %s9, 2
      %v1071 = vld [vmem:[%s1070] ss:$8 sm:$0x3]
      %v1073 = vperm.slane %v1071, 0
      %v1074 = vperm.slane %v1071, 1
      %v1077 = vmul.f32 %v1069, %v1073
      %v1078 = vmul.f32 %v1068, %v1074
      %1079 = vst [vmem:[#allocation4 + $0x20] sm:$0xff] %v1077
      %1080 = vst [vmem:[#allocation4 + $0x28] sm:$0xff] %v1078
      %1081 = vrot.lane.b32.xlu0 %v1027, 14
      %v1082 = vpop.permute.xlu0 %1081
      %1083 = vrot.lane.b32.xlu0 %v1028, 14
      %v1084 = vpop.permute.xlu0 %1083
      %vm1085 = vcmp.lt.s32.totalorder %v487, 14
      %v1086 = vsel %vm1085, %v1082, %v1084
      %v1087 = vsel %vm1085, %v1084, %v1082
      %s1088 = scalar_lea.vmem %s9, 3
      %v1089 = vld [vmem:[%s1088] ss:$8 sm:$0x3]
      %v1091 = vperm.slane %v1089, 0
      %v1092 = vperm.slane %v1089, 1
      %v1095 = vmul.f32 %v1087, %v1091
      %v1096 = vmul.f32 %v1086, %v1092
      %1097 = vst [vmem:[#allocation4 + $0x30] sm:$0xff] %v1095
      %1098 = vst [vmem:[#allocation4 + $0x38] sm:$0xff] %v1096
      %1099 = vrot.lane.b32.xlu0 %v1027, 1
      %v1100 = vpop.permute.xlu0 %1099
      %1101 = vrot.lane.b32.xlu0 %v1028, 1
      %v1102 = vpop.permute.xlu0 %1101
      %v1103 = vsel %vm562, %v1100, %v1102
      %v1104 = vsel %vm562, %v1102, %v1100
      %s1105 = scalar_lea.vmem %s9, 4
      %v1106 = vld [vmem:[%s1105] ss:$8 sm:$0x3]
      %v1108 = vperm.slane %v1106, 0
      %v1109 = vperm.slane %v1106, 1
      %v1112 = vmul.f32 %v1104, %v1108
      %v1113 = vmul.f32 %v1103, %v1109
      %1114 = vst [vmem:[#allocation4 + $0x40] sm:$0xff] %v1112
      %1115 = vst [vmem:[#allocation4 + $0x48] sm:$0xff] %v1113
      %1116 = vst [vmem:[#allocation4 + $0x50] sm:$0xff] %v1027
      %1117 = vst [vmem:[#allocation4 + $0x58] sm:$0xff] %v1028
      %1118 = vrot.lane.b32.xlu0 %v1027, 127
      %v1119 = vpop.permute.xlu0 %1118
      %1120 = vrot.lane.b32.xlu0 %v1028, 127
      %v1121 = vpop.permute.xlu0 %1120
      %v1122 = vsel %vm598, %v1119, %v1121
      %v1123 = vsel %vm598, %v1121, %v1119
      %s1124 = scalar_lea.vmem %s9, 6
      %v1125 = vld [vmem:[%s1124] ss:$8 sm:$0x3]
      %v1127 = vperm.slane %v1125, 0
      %v1128 = vperm.slane %v1125, 1
      %v1131 = vmul.f32 %v1122, %v1127
      %v1132 = vmul.f32 %v1123, %v1128
      %1133 = vst [vmem:[#allocation4 + $0x60] sm:$0xff] %v1131
      %1134 = vst [vmem:[#allocation4 + $0x68] sm:$0xff] %v1132
      %1135 = vrot.lane.b32.xlu0 %v1027, 126
      %v1136 = vpop.permute.xlu0 %1135
      %1137 = vrot.lane.b32.xlu0 %v1028, 126
      %v1138 = vpop.permute.xlu0 %1137
      %vm1139 = vcmp.lt.s32.totalorder %v487, 126
      %v1140 = vsel %vm1139, %v1136, %v1138
      %v1141 = vsel %vm1139, %v1138, %v1136
      %s1142 = scalar_lea.vmem %s9, 7
      %v1143 = vld [vmem:[%s1142] ss:$8 sm:$0x3]
      %v1145 = vperm.slane %v1143, 0
      %v1146 = vperm.slane %v1143, 1
      %v1149 = vmul.f32 %v1140, %v1145
      %v1150 = vmul.f32 %v1141, %v1146
      %1151 = vst [vmem:[#allocation4 + $0x70] sm:$0xff] %v1149
      %1152 = vst [vmem:[#allocation4 + $0x78] sm:$0xff] %v1150
      %1153 = vrot.lane.b32.xlu0 %v1027, 113
      %v1154 = vpop.permute.xlu0 %1153
      %1155 = vrot.lane.b32.xlu0 %v1028, 113
      %v1156 = vpop.permute.xlu0 %1155
      %v1157 = vsel %vm627, %v1154, %v1156
      %v1158 = vsel %vm627, %v1156, %v1154
      %s1159 = scalar_lea.vmem %s9, 16
      %v1160 = vld [vmem:[%s1159] ss:$8 sm:$0x3]
      %v1162 = vperm.slane %v1160, 0
      %v1163 = vperm.slane %v1160, 1
      %v1166 = vmul.f32 %v1157, %v1162
      %v1167 = vmul.f32 %v1158, %v1163
      %1168 = vst [vmem:[#allocation4 + $0x80] sm:$0xff] %v1166
      %1169 = vst [vmem:[#allocation4 + $0x88] sm:$0xff] %v1167
      %1170 = vrot.lane.b32.xlu0 %v1027, 112
      %v1171 = vpop.permute.xlu0 %1170
      %1172 = vrot.lane.b32.xlu0 %v1028, 112
      %v1173 = vpop.permute.xlu0 %1172
      %v1174 = vsel %vm650, %v1171, %v1173
      %v1175 = vsel %vm650, %v1173, %v1171
      %s1176 = scalar_lea.vmem %s9, 17
      %v1177 = vld [vmem:[%s1176] ss:$8 sm:$0x3]
      %v1179 = vperm.slane %v1177, 0
      %v1180 = vperm.slane %v1177, 1
      %v1183 = vmul.f32 %v1174, %v1179
      %v1184 = vmul.f32 %v1175, %v1180
      %1185 = vst [vmem:[#allocation4 + $0x90] sm:$0xff] %v1183
      %1186 = vst [vmem:[#allocation4 + $0x98] sm:$0xff] %v1184
      %1187 = vrot.lane.b32.xlu0 %v1027, 111
      %v1188 = vpop.permute.xlu0 %1187
      %1189 = vrot.lane.b32.xlu0 %v1028, 111
      %v1190 = vpop.permute.xlu0 %1189
      %v1191 = vsel %vm679, %v1188, %v1190
      %v1192 = vsel %vm679, %v1190, %v1188
      %s1193 = scalar_lea.vmem %s9, 18
      %v1194 = vld [vmem:[%s1193] ss:$8 sm:$0x3]
      %v1196 = vperm.slane %v1194, 0
      %v1197 = vperm.slane %v1194, 1
      %v1200 = vmul.f32 %v1191, %v1196
      %v1201 = vmul.f32 %v1192, %v1197
      %1202 = vst [vmem:[#allocation4 + $0xa0] sm:$0xff] %v1200
      %1203 = vst [vmem:[#allocation4 + $0xa8] sm:$0xff] %v1201
      %1204 = vrot.lane.b32.xlu0 %v1027, 110
      %v1205 = vpop.permute.xlu0 %1204
      %1206 = vrot.lane.b32.xlu0 %v1028, 110
      %v1207 = vpop.permute.xlu0 %1206
      %vm1208 = vcmp.lt.s32.totalorder %v487, 110
      %v1209 = vsel %vm1208, %v1205, %v1207
      %v1210 = vsel %vm1208, %v1207, %v1205
      %s1211 = scalar_lea.vmem %s9, 19
      %v1212 = vld [vmem:[%s1211] ss:$8 sm:$0x3]
      %v1214 = vperm.slane %v1212, 0
      %v1215 = vperm.slane %v1212, 1
      %v1218 = vmul.f32 %v1209, %v1214
      %v1219 = vmul.f32 %v1210, %v1215
      %1220 = vst [vmem:[#allocation4 + $0xb0] sm:$0xff] %v1218
      %1221 = vst [vmem:[#allocation4 + $0xb8] sm:$0xff] %v1219
      %1222 = vrot.lane.b32.xlu0 %v1027, 97
      %v1223 = vpop.permute.xlu0 %1222
      %1224 = vrot.lane.b32.xlu0 %v1028, 97
      %v1225 = vpop.permute.xlu0 %1224
      %vm1226 = vcmp.lt.s32.totalorder %v487, 97
      %v1227 = vsel %vm1226, %v1223, %v1225
      %v1228 = vsel %vm1226, %v1225, %v1223
      %s1229 = scalar_lea.vmem %s9, 20
      %v1230 = vld [vmem:[%s1229] ss:$8 sm:$0x3]
      %v1232 = vperm.slane %v1230, 0
      %v1233 = vperm.slane %v1230, 1
      %v1236 = vmul.f32 %v1227, %v1232
      %v1237 = vmul.f32 %v1228, %v1233
      %1238 = vst [vmem:[#allocation4 + $0xc0] sm:$0xff] %v1236
      %1239 = vst [vmem:[#allocation4 + $0xc8] sm:$0xff] %v1237
      %1240 = vrot.lane.b32.xlu0 %v1027, 96
      %v1241 = vpop.permute.xlu0 %1240
      %1242 = vrot.lane.b32.xlu0 %v1028, 96
      %v1243 = vpop.permute.xlu0 %1242
      %vm1244 = vcmp.lt.s32.totalorder %v487, 96
      %v1245 = vsel %vm1244, %v1241, %v1243
      %v1246 = vsel %vm1244, %v1243, %v1241
      %s1247 = scalar_lea.vmem %s9, 21
      %v1248 = vld [vmem:[%s1247] ss:$8 sm:$0x3]
      %v1250 = vperm.slane %v1248, 0
      %v1251 = vperm.slane %v1248, 1
      %v1254 = vmul.f32 %v1245, %v1250
      %v1255 = vmul.f32 %v1246, %v1251
      %1256 = vst [vmem:[#allocation4 + $0xd0] sm:$0xff] %v1254
      %1257 = vst [vmem:[#allocation4 + $0xd8] sm:$0xff] %v1255
      %1258 = vrot.lane.b32.xlu0 %v1027, 95
      %v1259 = vpop.permute.xlu0 %1258
      %1260 = vrot.lane.b32.xlu0 %v1028, 95
      %v1261 = vpop.permute.xlu0 %1260
      %vm1262 = vcmp.lt.s32.totalorder %v487, 95
      %v1263 = vsel %vm1262, %v1259, %v1261
      %v1264 = vsel %vm1262, %v1261, %v1259
      %s1265 = scalar_lea.vmem %s9, 22
      %v1266 = vld [vmem:[%s1265] ss:$8 sm:$0x3]
      %v1268 = vperm.slane %v1266, 0
      %v1269 = vperm.slane %v1266, 1
      %v1272 = vmul.f32 %v1263, %v1268
      %v1273 = vmul.f32 %v1264, %v1269
      %1274 = vst [vmem:[#allocation4 + $0xe0] sm:$0xff] %v1272
      %1275 = vst [vmem:[#allocation4 + $0xe8] sm:$0xff] %v1273
      %1276 = vrot.lane.b32.xlu0 %v1027, 94
      %v1277 = vpop.permute.xlu0 %1276
      %1278 = vrot.lane.b32.xlu0 %v1028, 94
      %v1279 = vpop.permute.xlu0 %1278
      %vm1280 = vcmp.lt.s32.totalorder %v487, 94
      %v1281 = vsel %vm1280, %v1277, %v1279
      %v1282 = vsel %vm1280, %v1279, %v1277
      %s1283 = scalar_lea.vmem %s9, 23
      %v1284 = vld [vmem:[%s1283] ss:$8 sm:$0x3]
      %v1286 = vperm.slane %v1284, 0
      %v1287 = vperm.slane %v1284, 1
      %v1290 = vmul.f32 %v1281, %v1286
      %v1291 = vmul.f32 %v1282, %v1287
      %1292 = vst [vmem:[#allocation4 + $0xf0] sm:$0xff] %v1290
      %1293 = vst [vmem:[#allocation4 + $0xf8] sm:$0xff] %v1291
      %v1294 = vld [vmem:[#allocation4] sm:$0xff]
      %v1295 = vld [vmem:[#allocation4 + $0x8] sm:$0xff]
      %v1296 = vld [vmem:[#allocation4 + $0x10] sm:$0xff]
      %v1297 = vld [vmem:[#allocation4 + $0x18] sm:$0xff]
      %v1298 = vld [vmem:[#allocation4 + $0x20] sm:$0xff]
      %v1299 = vld [vmem:[#allocation4 + $0x28] sm:$0xff]
      %v1300 = vld [vmem:[#allocation4 + $0x30] sm:$0xff]
      %v1301 = vld [vmem:[#allocation4 + $0x38] sm:$0xff]
      %v1302 = vld [vmem:[#allocation4 + $0x40] sm:$0xff]
      %v1303 = vld [vmem:[#allocation4 + $0x48] sm:$0xff]
      %v1304 = vld [vmem:[#allocation4 + $0x50] sm:$0xff]
      %v1305 = vld [vmem:[#allocation4 + $0x58] sm:$0xff]
      %v1306 = vld [vmem:[#allocation4 + $0x60] sm:$0xff]
      %v1307 = vld [vmem:[#allocation4 + $0x68] sm:$0xff]
      %v1308 = vld [vmem:[#allocation4 + $0x70] sm:$0xff]
      %v1309 = vld [vmem:[#allocation4 + $0x78] sm:$0xff]
      %v1310 = vld [vmem:[#allocation4 + $0x80] sm:$0xff]
      %v1311 = vld [vmem:[#allocation4 + $0x88] sm:$0xff]
      %v1312 = vld [vmem:[#allocation4 + $0x90] sm:$0xff]
      %v1313 = vld [vmem:[#allocation4 + $0x98] sm:$0xff]
      %v1314 = vld [vmem:[#allocation4 + $0xa0] sm:$0xff]
      %v1315 = vld [vmem:[#allocation4 + $0xa8] sm:$0xff]
      %v1316 = vld [vmem:[#allocation4 + $0xb0] sm:$0xff]
      %v1317 = vld [vmem:[#allocation4 + $0xb8] sm:$0xff]
      %v1318 = vld [vmem:[#allocation4 + $0xc0] sm:$0xff]
      %v1319 = vld [vmem:[#allocation4 + $0xc8] sm:$0xff]
      %v1320 = vld [vmem:[#allocation4 + $0xd0] sm:$0xff]
      %v1321 = vld [vmem:[#allocation4 + $0xd8] sm:$0xff]
      %v1322 = vld [vmem:[#allocation4 + $0xe0] sm:$0xff]
      %v1323 = vld [vmem:[#allocation4 + $0xe8] sm:$0xff]
      %v1324 = vld [vmem:[#allocation4 + $0xf0] sm:$0xff]
      %v1325 = vld [vmem:[#allocation4 + $0xf8] sm:$0xff]
      %1326 = vmatpush.msra.mxu0 %v1324
      %1327 = vmatpush.msra.mxu0 %v1322
      %1328 = vmatpush.msra.mxu0 %v1320
      %1329 = vmatpush.msra.mxu0 %v1318
      %1330 = vmatpush.msra.mxu0 %v1316
      %1331 = vmatpush.msra.mxu0 %v1314
      %1332 = vmatpush.msra.mxu0 %v1312
      %1333 = vmatpush.msra.mxu0 %v1310
      %1334 = vmatpush.msra.mxu0 %v1308
      %1335 = vmatpush.msra.mxu0 %v1306
      %1336 = vmatpush.msra.mxu0 %v1304
      %1337 = vmatpush.msra.mxu0 %v1302
      %1338 = vmatpush.msra.mxu0 %v1300
      %1339 = vmatpush.msra.mxu0 %v1298
      %1340 = vmatpush.msra.mxu0 %v1296
      %1341 = vmatpush.msra.mxu0 %v1294
      %1342 = vmatmul.f32.gmra.mxu0 %v428
      %v1343 = vpop.f32.mrf.mxu0
      %v1344 = vadd.f32 0.0, %v1343
      %1345 = vdwg.mxu0
      %1346 = vmatpush.msra.mxu0 %v1325
      %1347 = vmatpush.msra.mxu0 %v1323
      %1348 = vmatpush.msra.mxu0 %v1321
      %1349 = vmatpush.msra.mxu0 %v1319
      %1350 = vmatpush.msra.mxu0 %v1317
      %1351 = vmatpush.msra.mxu0 %v1315
      %1352 = vmatpush.msra.mxu0 %v1313
      %1353 = vmatpush.msra.mxu0 %v1311
      %1354 = vmatpush.msra.mxu0 %v1309
      %1355 = vmatpush.msra.mxu0 %v1307
      %1356 = vmatpush.msra.mxu0 %v1305
      %1357 = vmatpush.msra.mxu0 %v1303
      %1358 = vmatpush.msra.mxu0 %v1301
      %1359 = vmatpush.msra.mxu0 %v1299
      %1360 = vmatpush.msra.mxu0 %v1297
      %1361 = vmatpush.msra.mxu0 %v1295
      %1362 = vmatmul.f32.gmra.mxu0 %v428
      %v1363 = vpop.f32.mrf.mxu0
      %v1364 = vadd.f32 0.0, %v1363
      %1365 = vdwg.mxu0
      %1366 = vmatpush.msra.mxu0 %v1324
      %1367 = vmatpush.msra.mxu0 %v1322
      %1368 = vmatpush.msra.mxu0 %v1320
      %1369 = vmatpush.msra.mxu0 %v1318
      %1370 = vmatpush.msra.mxu0 %v1316
      %1371 = vmatpush.msra.mxu0 %v1314
      %1372 = vmatpush.msra.mxu0 %v1312
      %1373 = vmatpush.msra.mxu0 %v1310
      %1374 = vmatpush.msra.mxu0 %v1308
      %1375 = vmatpush.msra.mxu0 %v1306
      %1376 = vmatpush.msra.mxu0 %v1304
      %1377 = vmatpush.msra.mxu0 %v1302
      %1378 = vmatpush.msra.mxu0 %v1300
      %1379 = vmatpush.msra.mxu0 %v1298
      %1380 = vmatpush.msra.mxu0 %v1296
      %1381 = vmatpush.msra.mxu0 %v1294
      %1382 = vmatmul.f32.gmra.mxu0 %v429
      %v1383 = vpop.f32.mrf.mxu0
      %v1384 = vadd.f32 0.0, %v1383
      %1385 = vdwg.mxu0
      %1386 = vmatpush.msra.mxu0 %v1325
      %1387 = vmatpush.msra.mxu0 %v1323
      %1388 = vmatpush.msra.mxu0 %v1321
      %1389 = vmatpush.msra.mxu0 %v1319
      %1390 = vmatpush.msra.mxu0 %v1317
      %1391 = vmatpush.msra.mxu0 %v1315
      %1392 = vmatpush.msra.mxu0 %v1313
      %1393 = vmatpush.msra.mxu0 %v1311
      %1394 = vmatpush.msra.mxu0 %v1309
      %1395 = vmatpush.msra.mxu0 %v1307
      %1396 = vmatpush.msra.mxu0 %v1305
      %1397 = vmatpush.msra.mxu0 %v1303
      %1398 = vmatpush.msra.mxu0 %v1301
      %1399 = vmatpush.msra.mxu0 %v1299
      %1400 = vmatpush.msra.mxu0 %v1297
      %1401 = vmatpush.msra.mxu0 %v1295
      %1402 = vmatmul.f32.gmra.mxu0 %v429
      %v1403 = vpop.f32.mrf.mxu0
      %v1404 = vadd.f32 0.0, %v1403
      %1405 = vdwg.mxu0
      %1406 = vmatpush.msra.mxu0 %v445
      %1407 = vmatpush.msra.mxu0 %v444
      %1408 = vmatpush.msra.mxu0 %v443
      %1409 = vmatpush.msra.mxu0 %v442
      %1410 = vmatpush.msra.mxu0 %v441
      %1411 = vmatpush.msra.mxu0 %v440
      %1412 = vmatpush.msra.mxu0 %v439
      %1413 = vmatpush.msra.mxu0 %v438
      %1414 = vmatpush.msra.mxu0 %v437
      %1415 = vmatpush.msra.mxu0 %v436
      %1416 = vmatpush.msra.mxu0 %v435
      %1417 = vmatpush.msra.mxu0 %v434
      %1418 = vmatpush.msra.mxu0 %v433
      %1419 = vmatpush.msra.mxu0 %v432
      %1420 = vmatpush.msra.mxu0 %v431
      %1421 = vmatpush.msra.mxu0 %v430
      %1422 = vmatmul.f32.gmra.mxu0 %v1344
      %v1423 = vpop.f32.mrf.mxu0
      %v1424 = vadd.f32 0.0, %v1423
      %1425 = vdwg.mxu0
      %1426 = vmatpush.msra.mxu0 %v461
      %1427 = vmatpush.msra.mxu0 %v460
      %1428 = vmatpush.msra.mxu0 %v459
      %1429 = vmatpush.msra.mxu0 %v458
      %1430 = vmatpush.msra.mxu0 %v457
      %1431 = vmatpush.msra.mxu0 %v456
      %1432 = vmatpush.msra.mxu0 %v455
      %1433 = vmatpush.msra.mxu0 %v454
      %1434 = vmatpush.msra.mxu0 %v453
      %1435 = vmatpush.msra.mxu0 %v452
      %1436 = vmatpush.msra.mxu0 %v451
      %1437 = vmatpush.msra.mxu0 %v450
      %1438 = vmatpush.msra.mxu0 %v449
      %1439 = vmatpush.msra.mxu0 %v448
      %1440 = vmatpush.msra.mxu0 %v447
      %1441 = vmatpush.msra.mxu0 %v446
      %1442 = vmatmul.f32.gmra.mxu0 %v1364
      %v1443 = vpop.f32.mrf.mxu0
      %v1444 = vadd.f32 %v1424, %v1443
      %1445 = vdwg.mxu0
      %1446 = vmatpush.msra.mxu0 %v445
      %1447 = vmatpush.msra.mxu0 %v444
      %1448 = vmatpush.msra.mxu0 %v443
      %1449 = vmatpush.msra.mxu0 %v442
      %1450 = vmatpush.msra.mxu0 %v441
      %1451 = vmatpush.msra.mxu0 %v440
      %1452 = vmatpush.msra.mxu0 %v439
      %1453 = vmatpush.msra.mxu0 %v438
      %1454 = vmatpush.msra.mxu0 %v437
      %1455 = vmatpush.msra.mxu0 %v436
      %1456 = vmatpush.msra.mxu0 %v435
      %1457 = vmatpush.msra.mxu0 %v434
      %1458 = vmatpush.msra.mxu0 %v433
      %1459 = vmatpush.msra.mxu0 %v432
      %1460 = vmatpush.msra.mxu0 %v431
      %1461 = vmatpush.msra.mxu0 %v430
      %1462 = vmatmul.f32.gmra.mxu0 %v1384
      %v1463 = vpop.f32.mrf.mxu0
      %v1464 = vadd.f32 0.0, %v1463
      %1465 = vdwg.mxu0
      %1466 = vmatpush.msra.mxu0 %v461
      %1467 = vmatpush.msra.mxu0 %v460
      %1468 = vmatpush.msra.mxu0 %v459
      %1469 = vmatpush.msra.mxu0 %v458
      %1470 = vmatpush.msra.mxu0 %v457
      %1471 = vmatpush.msra.mxu0 %v456
      %1472 = vmatpush.msra.mxu0 %v455
      %1473 = vmatpush.msra.mxu0 %v454
      %1474 = vmatpush.msra.mxu0 %v453
      %1475 = vmatpush.msra.mxu0 %v452
      %1476 = vmatpush.msra.mxu0 %v451
      %1477 = vmatpush.msra.mxu0 %v450
      %1478 = vmatpush.msra.mxu0 %v449
      %1479 = vmatpush.msra.mxu0 %v448
      %1480 = vmatpush.msra.mxu0 %v447
      %1481 = vmatpush.msra.mxu0 %v446
      %1482 = vmatmul.f32.gmra.mxu0 %v1404
      %v1483 = vpop.f32.mrf.mxu0
      %v1484 = vadd.f32 %v1464, %v1483
      %1485 = vdwg.mxu0
      %1487 = vrot.lane.b32.xlu0 %v1484, 64
      %v1488 = vpop.permute.xlu0 %1487
      %vm1490 = vcmask 523264
      %v1491 = vsel %vm1490, %v1444, %v1488
      %1492 = vst [vmem:[%s424] sm:$0xf] %v1491
      %p1493 = scmp.lt.s32.totalorder %s24, 1
      %s1494 = scalar_select %p1493, %s24, 1
      %s1495 = smul.addr %s1494, 2
      %s1496 = smul.addr %s1495, 8
      %s1497 = scalar_lea.vmem %s11, %s1496
      %p1498 = scmp.lt.s32.totalorder %s24, 1
      %s1499 = scalar_select %p1498, %s24, 1
      %s1500 = smul.addr %s1499, 4
      %s1501 = scalar_lea.vmem %s12, %s1500
      // Predicated region
      $region65: #{unet_conv_block.1} parent=63 // pred_check
        %p1502 = pneg %p278
      $region66: #{unet_conv_block.1} parent=63 // pred_check_branch
        %1504 = sbr.rel (%p1502) target = $region68
      $region67: #{unet_conv_block.1} parent=63 // pred_region
        _
      $region68: #{unet_conv_block.1} parent=63 // pred_fallthru
        _
      // Predicated region
      $region69: #{unet_conv_block.1} parent=63 // pred_check
        %p1505 = pneg %p304
      $region70: #{unet_conv_block.1} parent=63 // pred_check_branch
        %1507 = sbr.rel (%p1505) target = $region72
      $region71: #{unet_conv_block.1} parent=63 // pred_region
        _
      $region72: #{unet_conv_block.1} parent=63 // pred_fallthru
        _
    $region64: #{unet_conv_block.1} parent=5 // pred_fallthru
      _
    %p1508 = scmp.le.s32.totalorder 2, %s19
    // Predicated region
    $region73: #{unet_conv_block.1} parent=5 // pred_check
      %p1509 = pneg %p1508
    $region74: #{unet_conv_block.1} parent=5 // pred_check_branch
      %1511 = sbr.rel (%p1509) target = $region76
    $region75: #{unet_conv_block.1} parent=5 // pred_region
      %s1512 = ssub.s32 %s19, 2
      // Predicated region
      $region77: #{unet_conv_block.1} parent=75 // pred_check
        %p1513 = pneg %p284
      $region78: #{unet_conv_block.1} parent=75 // pred_check_branch
        %1515 = sbr.rel (%p1513) target = $region80
      $region79: #{unet_conv_block.1} parent=75 // pred_region
        %p1516 = scmp.lt.s32.totalorder %s25, 1
        %s1517 = scalar_select %p1516, %s25, 1
        %s1518 = smul.addr %s1517, 2
        %s1519 = smul.addr %s1518, 8
        %s1520 = scalar_lea.vmem %s11, %s1519
      $region80: #{unet_conv_block.1} parent=75 // pred_fallthru
        _
      // Predicated region
      $region81: #{unet_conv_block.1} parent=75 // pred_check
        %p1521 = pneg %p310
      $region82: #{unet_conv_block.1} parent=75 // pred_check_branch
        %1523 = sbr.rel (%p1521) target = $region84
      $region83: #{unet_conv_block.1} parent=75 // pred_region
        %p1524 = scmp.lt.s32.totalorder %s25, 1
        %s1525 = scalar_select %p1524, %s25, 1
        %s1526 = smul.addr %s1525, 4
        %s1527 = scalar_lea.vmem %s12, %s1526
      $region84: #{unet_conv_block.1} parent=75 // pred_fallthru
        _
    $region76: #{unet_conv_block.1} parent=5 // pred_fallthru
      _
  $region6: #{unet_conv_block.1} parent=0 // loop_footer
    %s23 = sadd.s32 1, %s19
  $region7: #{unet_conv_block.1} parent=0 // loop_footer_branch
    %18 = sbr.rel target = $region3
  $region8: #{unet_conv_block.1} parent=0 // loop_exit
    _

</llo_original>
